<compile_context>
chip_gen: v6e
topology: v6e:2x2x1
jax: 0.10.0
libtpu: 0.0.40
codegen_flags: <defaults>
</compile_context>

<pallas_src>
import jax
import jax.numpy as jnp
from jax import lax
from jax.experimental import pallas as pl
from jax.experimental.pallas import tpu as pltpu


_NEG = float(jnp.finfo(jnp.float32).min)
_VMEM_GEMM = 16 * 1024 * 1024


def _round_up(x, m):
    return (x + m - 1) // m * m


# ---------------------------------------------------------------------------
# Kernel 1: tiled bf16 im2col GEMM for the 7x7 / stride-2 conv (Cout = 64).
# ---------------------------------------------------------------------------
def _matmul_kernel(a_ref, b_ref, o_ref):
    o_ref[...] = jnp.dot(a_ref[...], b_ref[...],
                         preferred_element_type=jnp.float32).astype(o_ref.dtype)


def conv_gemm(patches_bf16, w_mat_bf16, tm=1024):
    """patches: (M, Kp) bf16, weights: (Kp, Cout) bf16 -> (M, Cout) bf16."""
    m, k = patches_bf16.shape
    _, n = w_mat_bf16.shape
    tm = min(tm, _round_up(m, 16))
    m_pad = _round_up(m, tm)
    if m_pad != m:
        patches_bf16 = jnp.pad(patches_bf16, ((0, m_pad - m), (0, 0)))

    out = pl.pallas_call(
        _matmul_kernel,
        out_shape=jax.ShapeDtypeStruct((m_pad, n), jnp.bfloat16),
        grid=(m_pad // tm,),
        in_specs=[pl.BlockSpec((tm, k), lambda i: (i, 0)),
                  pl.BlockSpec((k, n), lambda i: (0, 0))],   # weight stays VMEM resident
        out_specs=pl.BlockSpec((tm, n), lambda i: (i, 0)),
        compiler_params=pltpu.CompilerParams(
            dimension_semantics=("parallel",),
            vmem_limit_bytes=_VMEM_GEMM),
    )(patches_bf16, w_mat_bf16)
    return out if m_pad == m else out[:m]


# ---------------------------------------------------------------------------
# Corner pooling (TopPool + LeftPool) + ReLU, shared by both post-conv passes.
# ---------------------------------------------------------------------------
def _suffix_max(x, axis):
    """Reverse cumulative max along `axis` via log-doubling (roll + small iota mask)."""
    size = x.shape[axis]
    if size == 1:
        return x
    shape = [1] * x.ndim
    shape[axis] = size
    idx = lax.broadcasted_iota(jnp.int32, tuple(shape), axis)   # only over pooled axis
    m = x
    s = 1
    while s < size:
        shifted = jnp.where(idx < size - s, jnp.roll(m, -s, axis=axis), _NEG)
        m = jnp.maximum(m, shifted)
        s *= 2
    return m


def _pool_tile(x, carry):
    """x: (OH, tW, C) f32. carry: (OH, 1, C) running LeftPool suffix-max of all columns
    to the right of this tile. Returns (ReLU(TopPool + LeftPool), new carry)."""
    top = _suffix_max(x, 0)                           # TopPool : suffix max along H
    left = jnp.maximum(_suffix_max(x, 1), carry)      # LeftPool: suffix max along W (+carry)
    new_carry = left[:, 0:1, :]                       # suffix max from this tile's left edge
    y = jnp.maximum(top + left, 0.0)                  # ReLU(pool1 + pool2)
    return y, new_carry


def _pick_w_tile(oh, ow, c):
    """Largest multiple-of-16 divisor of OW keeping the f32 working block ~2 MiB."""
    cap = max(16, (2 * 1024 * 1024 // (oh * c * 4)) // 16 * 16)
    if ow <= cap:
        return ow
    t = cap
    while t >= 16:
        if ow % t == 0:
            return t
        t -= 16
    return ow   # fallback: full-extent block (always a legal block shape)


def _pool_vmem_limit(oh, tw, c):
    block_f32 = oh * tw * c * 4
    return int(min(96 * 1024 * 1024, max(32 * 1024 * 1024, 12 * block_f32)))


# ---------------------------------------------------------------------------
# Kernel 2: pool + ReLU (recomputed), per-image channel sum / sum-of-squares.
# Grid (N parallel, W-tiles right-to-left arbitrary).
# ---------------------------------------------------------------------------
def _pool_stats_kernel(x_ref, sum_ref, sq_ref, carry_ref):
    @pl.when(pl.program_id(1) == 0)          # rightmost W tile of this image
    def _():
        carry_ref[...] = jnp.full(carry_ref.shape, _NEG, carry_ref.dtype)
        sum_ref[...] = jnp.zeros_like(sum_ref)
        sq_ref[...] = jnp.zeros_like(sq_ref)

    x = x_ref[0].astype(jnp.float32)         # (OH, tW, C), f32 math on the VPU
    y, new_carry = _pool_tile(x, carry_ref[...])
    carry_ref[...] = new_carry
    sum_ref[...] += jnp.sum(y, axis=(0, 1), keepdims=True)
    sq_ref[...] += jnp.sum(y * y, axis=(0, 1), keepdims=True)


def pool_stats(conv_nhwc):
    n, oh, ow, c = conv_nhwc.shape
    tw = _pick_w_tile(oh, ow, c)
    nwt = ow // tw
    return pl.pallas_call(
        _pool_stats_kernel,
        out_shape=(jax.ShapeDtypeStruct((n, 1, c), jnp.float32),
                   jax.ShapeDtypeStruct((n, 1, c), jnp.float32)),
        grid=(n, nwt),
        in_specs=[pl.BlockSpec((1, oh, tw, c),
                               lambda i, t: (i, 0, nwt - 1 - t, 0))],
        out_specs=(pl.BlockSpec((1, 1, c), lambda i, t: (i, 0, 0)),
                   pl.BlockSpec((1, 1, c), lambda i, t: (i, 0, 0))),
        scratch_shapes=[pltpu.VMEM((oh, 1, c), jnp.float32)],     # LeftPool carry
        compiler_params=pltpu.CompilerParams(
            dimension_semantics=("parallel", "arbitrary"),
            vmem_limit_bytes=_pool_vmem_limit(oh, tw, c)),
    )(conv_nhwc)


# ---------------------------------------------------------------------------
# Kernel 3: recompute pool + ReLU and apply the pre-folded BatchNorm scale/shift.
# ---------------------------------------------------------------------------
def _pool_norm_kernel(x_ref, scale_ref, shift_ref, o_ref, carry_ref):
    @pl.when(pl.program_id(1) == 0)
    def _():
        carry_ref[...] = jnp.full(carry_ref.shape, _NEG, carry_ref.dtype)

    x = x_ref[0].astype(jnp.float32)
    y, new_carry = _pool_tile(x, carry_ref[...])
    carry_ref[...] = new_carry
    o_ref[0] = y * scale_ref[...] + shift_ref[...]   # (1,1,C) broadcast -> pure FMA stream


def pool_normalize(conv_nhwc, scale, shift):
    n, oh, ow, c = conv_nhwc.shape
    tw = _pick_w_tile(oh, ow, c)
    nwt = ow // tw
    return pl.pallas_call(
        _pool_norm_kernel,
        out_shape=jax.ShapeDtypeStruct((n, oh, ow, c), jnp.float32),
        grid=(n, nwt),
        in_specs=[pl.BlockSpec((1, oh, tw, c),
                               lambda i, t: (i, 0, nwt - 1 - t, 0)),
                  pl.BlockSpec((1, 1, c), lambda i, t: (0, 0, 0)),
                  pl.BlockSpec((1, 1, c), lambda i, t: (0, 0, 0))],
        out_specs=pl.BlockSpec((1, oh, tw, c),
                               lambda i, t: (i, 0, nwt - 1 - t, 0)),
        scratch_shapes=[pltpu.VMEM((oh, 1, c), jnp.float32)],     # LeftPool carry
        compiler_params=pltpu.CompilerParams(
            dimension_semantics=("parallel", "arbitrary"),
            vmem_limit_bytes=_pool_vmem_limit(oh, tw, c)),
    )(conv_nhwc, scale, shift)


# ---------------------------------------------------------------------------
# Full forward (layout glue: NCHW<->NHWC, padding, wrapper-side im2col, BN fold).
# ---------------------------------------------------------------------------
def pool_model_forward(x_nchw, conv_w, gamma, beta, eps=1e-5):
    n, cin, h, w = x_nchw.shape
    kh = kw = 7
    stride, pad = 2, 3
    oh = (h + 2 * pad - kh) // stride + 1
    ow = (w + 2 * pad - kw) // stride + 1
    cout = conv_w.shape[0]

    k = kh * kw * cin                      # 147
    k_pad = _round_up(k, 16)               # 160: bf16 sublane multiple, full-extent lane block

    # --- wrapper-side im2col in bf16 (TODO(synk): move inside the GEMM kernel) ---
    xp = jnp.transpose(x_nchw, (0, 2, 3, 1)).astype(jnp.bfloat16)   # NCHW -> NHWC
    xp = jnp.pad(xp, ((0, 0), (pad, pad), (pad, pad), (0, 0)))
    cols = [xp[:, i:i + stride * oh:stride, j:j + stride * ow:stride, :]
            for i in range(kh) for j in range(kw)]
    patches = jnp.concatenate(cols, axis=-1).reshape(n * oh * ow, k)
    patches = jnp.pad(patches, ((0, 0), (0, k_pad - k)))

    # (Cout, Cin, KH, KW) -> (KH, KW, Cin, Cout) -> (K, Cout), zero-padded along K.
    w_mat = jnp.transpose(conv_w, (2, 3, 1, 0)).reshape(k, cout).astype(jnp.bfloat16)
    w_mat = jnp.pad(w_mat, ((0, k_pad - k), (0, 0)))

    conv = conv_gemm(patches, w_mat).reshape(n, oh, ow, cout)       # bf16 NHWC, 64 ch

    # --- pass 1: per-image pooled sum / sumsq partials; fold BN stats in the wrapper ---
    ch_sum, ch_sq = pool_stats(conv)                                # (N,1,C) f32 each
    count = n * oh * ow
    g = gamma.astype(jnp.float32)
    b = beta.astype(jnp.float32)
    mean = jnp.sum(ch_sum, axis=(0, 1)) / count
    var = jnp.sum(ch_sq, axis=(0, 1)) / count - mean * mean         # biased (training mode)
    inv = lax.rsqrt(var + eps)
    scale = (g * inv).reshape(1, 1, cout)
    shift = (b - mean * g * inv).reshape(1, 1, cout)

    # --- pass 2: recompute pool + ReLU, apply scale/shift, write f32 output once ---
    out_nhwc = pool_normalize(conv, scale, shift)                   # (N, OH, OW, 64) f32

    # TODO(synk): fold this transpose into the normalize kernel's output store.
    return jnp.transpose(out_nhwc, (0, 3, 1, 2))                    # back to NCHW


# ---------------------------------------------------------------------------
# Pure-JAX reference (f32) for an in-script sanity check.
# ---------------------------------------------------------------------------
def _reference(x, conv_w, gamma, beta, eps=1e-5):
    conv = lax.conv_general_dilated(
        x, conv_w, window_strides=(2, 2), padding=((3, 3), (3, 3)),
        dimension_numbers=("NCHW", "OIHW", "NCHW"))
    top = lax.cummax(conv, axis=2, reverse=True)      # TopPool : suffix max along H
    left = lax.cummax(conv, axis=3, reverse=True)     # LeftPool: suffix max along W
    y = jnp.maximum(top + left, 0.0)
    mean = jnp.mean(y, axis=(0, 2, 3), keepdims=True)
    var = jnp.mean((y - mean) ** 2, axis=(0, 2, 3), keepdims=True)
    return ((y - mean) * lax.rsqrt(var + eps) * gamma.reshape(1, -1, 1, 1)
            + beta.reshape(1, -1, 1, 1))


if __name__ == "__main__":
    key = jax.random.PRNGKey(0)
    k1, k2, k3, k4 = jax.random.split(key, 4)

    N, Cin, H, W = 2, 3, 16, 16
    Cout = 64

    x = jax.random.normal(k1, (N, Cin, H, W), jnp.float32)
    conv_w = 0.05 * jax.random.normal(k2, (Cout, Cin, 7, 7), jnp.float32)
    gamma = 1.0 + 0.1 * jax.random.normal(k3, (Cout,), jnp.float32)
    beta = 0.1 * jax.random.normal(k4, (Cout,), jnp.float32)

    out = jax.jit(pool_model_forward)(x, conv_w, gamma, beta)
    out = jax.block_until_ready(out)
    assert out.shape == (N, Cout, H // 2, W // 2)
    assert bool(jnp.isfinite(out).all())

    ref = _reference(x, conv_w, gamma, beta)
    max_err = float(jnp.max(jnp.abs(out - ref)))
    assert max_err < 0.3, f"max abs error vs reference too large: {max_err}"

    print("KERNEL_OK")
</pallas_src>

<mosaic_0001>
module attributes {stable_mosaic.version = 11 : i64} {
  func.func @_matmul_kernel(%arg0: i32, %arg1: memref<128x160xbf16, #tpu.memory_space<vmem>>, %arg2: memref<160x64xbf16, #tpu.memory_space<vmem>>, %arg3: memref<128x64xbf16, #tpu.memory_space<vmem>>) attributes {dimension_semantics = [#tpu.dimension_semantics<parallel>], iteration_bounds = array<i64: 1>, scalar_prefetch = 0 : i64, scratch_operands = 0 : i64, tpu.core_type = #tpu.core_type<tc>, window_params = [{transform_indices = @transform_0, window_bounds = array<i64: 128, 160>}, {pipeline_mode = #tpu.pipeline_mode<synchronous>, transform_indices = @transform_1, window_bounds = array<i64: 160, 64>}, {transform_indices = @transform_2, window_bounds = array<i64: 128, 64>}]} {
    %c0 = arith.constant 0 : index
    %c0_0 = arith.constant 0 : index
    %0 = vector.load %arg1[%c0, %c0_0] : memref<128x160xbf16, #tpu.memory_space<vmem>>, vector<128x160xbf16>
    %c0_1 = arith.constant 0 : index
    %c0_2 = arith.constant 0 : index
    %1 = vector.load %arg2[%c0_1, %c0_2] : memref<160x64xbf16, #tpu.memory_space<vmem>>, vector<160x64xbf16>
    %cst = arith.constant dense<0.000000e+00> : vector<128x64xf32>
    %2 = tpu.matmul %0, %1, %cst {dimension_numbers = #tpu.dot_dimension_numbers<[1], [0], [0], [1], [0, 0, 1, 1], [], []>} : vector<128x160xbf16>, vector<160x64xbf16>, vector<128x64xf32> -> vector<128x64xf32>
    %3 = arith.truncf %2 : vector<128x64xf32> to vector<128x64xbf16>
    %c0_3 = arith.constant 0 : index
    %c0_4 = arith.constant 0 : index
    %4 = vector.load %arg3[%c0_3, %c0_4] : memref<128x64xbf16, #tpu.memory_space<vmem>>, vector<128x64xbf16>
    tpu.vector_store %arg3[%c0_3, %c0_4], %3 {strides = array<i32>} : memref<128x64xbf16, #tpu.memory_space<vmem>>, vector<128x64xbf16>,
    return
  }
  func.func @transform_0(%arg0: i32) -> (i32, i32) {
    %c0_i32 = arith.constant 0 : i32
    %c0_i32_0 = arith.constant 0 : i32
    return %arg0, %c0_i32 : i32, i32
  }
  func.func @transform_1(%arg0: i32) -> (i32, i32) {
    %c0_i32 = arith.constant 0 : i32
    %c0_i32_0 = arith.constant 0 : i32
    %c0_i32_1 = arith.constant 0 : i32
    return %c0_i32, %c0_i32_0 : i32, i32
  }
  func.func @transform_2(%arg0: i32) -> (i32, i32) {
    %c0_i32 = arith.constant 0 : i32
    %c0_i32_0 = arith.constant 0 : i32
    return %arg0, %c0_i32 : i32, i32
  }
}

module attributes {stable_mosaic.version = 11 : i64} {
  func.func @_pool_stats_kernel(%arg0: i32, %arg1: i32, %arg2: memref<1x8x8x64xbf16, #tpu.memory_space<vmem>>, %arg3: memref<1x1x64xf32, #tpu.memory_space<vmem>>, %arg4: memref<1x1x64xf32, #tpu.memory_space<vmem>>, %arg5: memref<8x1x64xf32, #tpu.memory_space<vmem>>) attributes {dimension_semantics = [#tpu.dimension_semantics<parallel>, #tpu.dimension_semantics<arbitrary>], iteration_bounds = array<i64: 2, 1>, scalar_prefetch = 0 : i64, scratch_operands = 1 : i64, tpu.core_type = #tpu.core_type<tc>, window_params = [{transform_indices = @transform_0, window_bounds = array<i64: 1, 8, 8, 64>}, {transform_indices = @transform_1, window_bounds = array<i64: 1, 1, 64>}, {transform_indices = @transform_2, window_bounds = array<i64: 1, 1, 64>}]} {
    %c0_i32 = arith.constant 0 : i32
    %0 = arith.cmpi eq, %arg1, %c0_i32 : i32
    %1 = arith.extui %0 : i1 to i32
    %c0_i32_0 = arith.constant 0 : i32
    %2 = arith.cmpi ne, %1, %c0_i32_0 : i32
    scf.if %2 {
      %cst_33 = arith.constant -3.40282347E+38 : f32
      %87 = vector.broadcast %cst_33 : f32 to vector<8x1x64xf32>
      %c0_34 = arith.constant 0 : index
      %c0_35 = arith.constant 0 : index
      %c0_36 = arith.constant 0 : index
      %88 = vector.load %arg5[%c0_34, %c0_35, %c0_36] : memref<8x1x64xf32, #tpu.memory_space<vmem>>, vector<8x1x64xf32>
      tpu.vector_store %arg5[%c0_34, %c0_35, %c0_36], %87 {strides = array<i32>} : memref<8x1x64xf32, #tpu.memory_space<vmem>>, vector<8x1x64xf32>,
      %cst_37 = arith.constant 0.000000e+00 : f32
      %89 = vector.broadcast %cst_37 : f32 to vector<1x1x64xf32>
      %c0_38 = arith.constant 0 : index
      %c0_39 = arith.constant 0 : index
      %c0_40 = arith.constant 0 : index
      %90 = vector.load %arg3[%c0_38, %c0_39, %c0_40] : memref<1x1x64xf32, #tpu.memory_space<vmem>>, vector<1x1x64xf32>
      tpu.vector_store %arg3[%c0_38, %c0_39, %c0_40], %89 {strides = array<i32>} : memref<1x1x64xf32, #tpu.memory_space<vmem>>, vector<1x1x64xf32>,
      %cst_41 = arith.constant 0.000000e+00 : f32
      %91 = vector.broadcast %cst_41 : f32 to vector<1x1x64xf32>
      %c0_42 = arith.constant 0 : index
      %c0_43 = arith.constant 0 : index
      %c0_44 = arith.constant 0 : index
      %92 = vector.load %arg4[%c0_42, %c0_43, %c0_44] : memref<1x1x64xf32, #tpu.memory_space<vmem>>, vector<1x1x64xf32>
      tpu.vector_store %arg4[%c0_42, %c0_43, %c0_44], %91 {strides = array<i32>} : memref<1x1x64xf32, #tpu.memory_space<vmem>>, vector<1x1x64xf32>,
    } else {
    }
    %c0 = arith.constant 0 : index
    %c0_1 = arith.constant 0 : index
    %c0_2 = arith.constant 0 : index
    %c0_3 = arith.constant 0 : index
    %3 = vector.load %arg2[%c0, %c0_1, %c0_2, %c0_3] : memref<1x8x8x64xbf16, #tpu.memory_space<vmem>>, vector<1x8x8x64xbf16>
    %4 = vector.shape_cast %3 : vector<1x8x8x64xbf16> to vector<8x8x64xbf16>
    %5 = arith.extf %4 : vector<8x8x64xbf16> to vector<8x8x64xf32>
    %c0_4 = arith.constant 0 : index
    %c0_5 = arith.constant 0 : index
    %c0_6 = arith.constant 0 : index
    %6 = vector.load %arg5[%c0_4, %c0_5, %c0_6] : memref<8x1x64xf32, #tpu.memory_space<vmem>>, vector<8x1x64xf32>
    %7 = tpu.iota {dimensions = array<i32: 0>} : vector<8x1x1xi32>
    %c7_i32 = arith.constant 7 : i32
    %8 = vector.broadcast %c7_i32 : i32 to vector<8x1x1xi32>
    %9 = arith.cmpi slt, %7, %8 : vector<8x1x1xi32>
    %10 = vector.extract_strided_slice %5 {offsets = [1, 0, 0], sizes = [7, 8, 64], strides = [1, 1, 1]} : vector<8x8x64xf32> to vector<7x8x64xf32>
    %11 = vector.extract_strided_slice %5 {offsets = [0, 0, 0], sizes = [1, 8, 64], strides = [1, 1, 1]} : vector<8x8x64xf32> to vector<1x8x64xf32>
    %12 = tpu.concatenate %10, %11 in 0 : vector<7x8x64xf32>, vector<1x8x64xf32> -> vector<8x8x64xf32>
    %cst = arith.constant -3.40282347E+38 : f32
    %13 = vector.shape_cast %9 : vector<8x1x1xi1> to vector<8x1x1xi1>
    %14 = vector.broadcast %13 : vector<8x1x1xi1> to vector<8x8x64xi1>
    %15 = vector.broadcast %cst : f32 to vector<8x8x64xf32>
    %16 = arith.select %14, %12, %15 : vector<8x8x64xi1>, vector<8x8x64xf32>
    %17 = arith.maximumf %5, %16 : vector<8x8x64xf32>
    %c6_i32 = arith.constant 6 : i32
    %18 = vector.broadcast %c6_i32 : i32 to vector<8x1x1xi32>
    %19 = arith.cmpi slt, %7, %18 : vector<8x1x1xi32>
    %20 = vector.extract_strided_slice %17 {offsets = [2, 0, 0], sizes = [6, 8, 64], strides = [1, 1, 1]} : vector<8x8x64xf32> to vector<6x8x64xf32>
    %21 = vector.extract_strided_slice %17 {offsets = [0, 0, 0], sizes = [2, 8, 64], strides = [1, 1, 1]} : vector<8x8x64xf32> to vector<2x8x64xf32>
    %22 = tpu.concatenate %20, %21 in 0 : vector<6x8x64xf32>, vector<2x8x64xf32> -> vector<8x8x64xf32>
    %cst_7 = arith.constant -3.40282347E+38 : f32
    %23 = vector.shape_cast %19 : vector<8x1x1xi1> to vector<8x1x1xi1>
    %24 = vector.broadcast %23 : vector<8x1x1xi1> to vector<8x8x64xi1>
    %25 = vector.broadcast %cst_7 : f32 to vector<8x8x64xf32>
    %26 = arith.select %24, %22, %25 : vector<8x8x64xi1>, vector<8x8x64xf32>
    %27 = arith.maximumf %17, %26 : vector<8x8x64xf32>
    %c4_i32 = arith.constant 4 : i32
    %28 = vector.broadcast %c4_i32 : i32 to vector<8x1x1xi32>
    %29 = arith.cmpi slt, %7, %28 : vector<8x1x1xi32>
    %30 = vector.extract_strided_slice %27 {offsets = [4, 0, 0], sizes = [4, 8, 64], strides = [1, 1, 1]} : vector<8x8x64xf32> to vector<4x8x64xf32>
    %31 = vector.extract_strided_slice %27 {offsets = [0, 0, 0], sizes = [4, 8, 64], strides = [1, 1, 1]} : vector<8x8x64xf32> to vector<4x8x64xf32>
    %32 = tpu.concatenate %30, %31 in 0 : vector<4x8x64xf32>, vector<4x8x64xf32> -> vector<8x8x64xf32>
    %cst_8 = arith.constant -3.40282347E+38 : f32
    %33 = vector.shape_cast %29 : vector<8x1x1xi1> to vector<8x1x1xi1>
    %34 = vector.broadcast %33 : vector<8x1x1xi1> to vector<8x8x64xi1>
    %35 = vector.broadcast %cst_8 : f32 to vector<8x8x64xf32>
    %36 = arith.select %34, %32, %35 : vector<8x8x64xi1>, vector<8x8x64xf32>
    %37 = arith.maximumf %27, %36 : vector<8x8x64xf32>
    %38 = tpu.iota {dimensions = array<i32: 1>} : vector<1x8x1xi32>
    %c7_i32_9 = arith.constant 7 : i32
    %39 = vector.broadcast %c7_i32_9 : i32 to vector<1x8x1xi32>
    %40 = arith.cmpi slt, %38, %39 : vector<1x8x1xi32>
    %41 = vector.extract_strided_slice %5 {offsets = [0, 1, 0], sizes = [8, 7, 64], strides = [1, 1, 1]} : vector<8x8x64xf32> to vector<8x7x64xf32>
    %42 = vector.extract_strided_slice %5 {offsets = [0, 0, 0], sizes = [8, 1, 64], strides = [1, 1, 1]} : vector<8x8x64xf32> to vector<8x1x64xf32>
    %43 = tpu.concatenate %41, %42 in 1 : vector<8x7x64xf32>, vector<8x1x64xf32> -> vector<8x8x64xf32>
    %cst_10 = arith.constant -3.40282347E+38 : f32
    %44 = vector.shape_cast %40 : vector<1x8x1xi1> to vector<1x8x1xi1>
    %45 = vector.broadcast %44 : vector<1x8x1xi1> to vector<8x8x64xi1>
    %46 = vector.broadcast %cst_10 : f32 to vector<8x8x64xf32>
    %47 = arith.select %45, %43, %46 : vector<8x8x64xi1>, vector<8x8x64xf32>
    %48 = arith.maximumf %5, %47 : vector<8x8x64xf32>
    %c6_i32_11 = arith.constant 6 : i32
    %49 = vector.broadcast %c6_i32_11 : i32 to vector<1x8x1xi32>
    %50 = arith.cmpi slt, %38, %49 : vector<1x8x1xi32>
    %51 = vector.extract_strided_slice %48 {offsets = [0, 2, 0], sizes = [8, 6, 64], strides = [1, 1, 1]} : vector<8x8x64xf32> to vector<8x6x64xf32>
    %52 = vector.extract_strided_slice %48 {offsets = [0, 0, 0], sizes = [8, 2, 64], strides = [1, 1, 1]} : vector<8x8x64xf32> to vector<8x2x64xf32>
    %53 = tpu.concatenate %51, %52 in 1 : vector<8x6x64xf32>, vector<8x2x64xf32> -> vector<8x8x64xf32>
    %cst_12 = arith.constant -3.40282347E+38 : f32
    %54 = vector.shape_cast %50 : vector<1x8x1xi1> to vector<1x8x1xi1>
    %55 = vector.broadcast %54 : vector<1x8x1xi1> to vector<8x8x64xi1>
    %56 = vector.broadcast %cst_12 : f32 to vector<8x8x64xf32>
    %57 = arith.select %55, %53, %56 : vector<8x8x64xi1>, vector<8x8x64xf32>
    %58 = arith.maximumf %48, %57 : vector<8x8x64xf32>
    %c4_i32_13 = arith.constant 4 : i32
    %59 = vector.broadcast %c4_i32_13 : i32 to vector<1x8x1xi32>
    %60 = arith.cmpi slt, %38, %59 : vector<1x8x1xi32>
    %61 = vector.extract_strided_slice %58 {offsets = [0, 4, 0], sizes = [8, 4, 64], strides = [1, 1, 1]} : vector<8x8x64xf32> to vector<8x4x64xf32>
    %62 = vector.extract_strided_slice %58 {offsets = [0, 0, 0], sizes = [8, 4, 64], strides = [1, 1, 1]} : vector<8x8x64xf32> to vector<8x4x64xf32>
    %63 = tpu.concatenate %61, %62 in 1 : vector<8x4x64xf32>, vector<8x4x64xf32> -> vector<8x8x64xf32>
    %cst_14 = arith.constant -3.40282347E+38 : f32
    %64 = vector.shape_cast %60 : vector<1x8x1xi1> to vector<1x8x1xi1>
    %65 = vector.broadcast %64 : vector<1x8x1xi1> to vector<8x8x64xi1>
    %66 = vector.broadcast %cst_14 : f32 to vector<8x8x64xf32>
    %67 = arith.select %65, %63, %66 : vector<8x8x64xi1>, vector<8x8x64xf32>
    %68 = arith.maximumf %58, %67 : vector<8x8x64xf32>
    %69 = vector.broadcast %6 : vector<8x1x64xf32> to vector<8x8x64xf32>
    %70 = arith.maximumf %68, %69 : vector<8x8x64xf32>
    %71 = vector.extract_strided_slice %70 {offsets = [0, 0, 0], sizes = [8, 1, 64], strides = [1, 1, 1]} : vector<8x8x64xf32> to vector<8x1x64xf32>
    %72 = arith.addf %37, %70 : vector<8x8x64xf32>
    %cst_15 = arith.constant 0.000000e+00 : f32
    %73 = vector.broadcast %cst_15 : f32 to vector<8x8x64xf32>
    %74 = arith.maximumf %72, %73 : vector<8x8x64xf32>
    %c0_16 = arith.constant 0 : index
    %c0_17 = arith.constant 0 : index
    %c0_18 = arith.constant 0 : index
    %75 = vector.load %arg5[%c0_16, %c0_17, %c0_18] : memref<8x1x64xf32, #tpu.memory_space<vmem>>, vector<8x1x64xf32>
    tpu.vector_store %arg5[%c0_16, %c0_17, %c0_18], %71 {strides = array<i32>} : memref<8x1x64xf32, #tpu.memory_space<vmem>>, vector<8x1x64xf32>,
    %c0_19 = arith.constant 0 : index
    %c0_20 = arith.constant 0 : index
    %c0_21 = arith.constant 0 : index
    %76 = vector.load %arg3[%c0_19, %c0_20, %c0_21] : memref<1x1x64xf32, #tpu.memory_space<vmem>>, vector<1x1x64xf32>
    %cst_22 = arith.constant dense<0.000000e+00> : vector<64xf32>
    %77 = vector.multi_reduction <add>, %74, %cst_22 [0, 1] : vector<8x8x64xf32> to vector<64xf32>
    %78 = vector.shape_cast %77 : vector<64xf32> to vector<1x1x64xf32>
    %79 = arith.addf %76, %78 : vector<1x1x64xf32>
    %c0_23 = arith.constant 0 : index
    %c0_24 = arith.constant 0 : index
    %c0_25 = arith.constant 0 : index
    %80 = vector.load %arg3[%c0_23, %c0_24, %c0_25] : memref<1x1x64xf32, #tpu.memory_space<vmem>>, vector<1x1x64xf32>
    tpu.vector_store %arg3[%c0_23, %c0_24, %c0_25], %79 {strides = array<i32>} : memref<1x1x64xf32, #tpu.memory_space<vmem>>, vector<1x1x64xf32>,
    %c0_26 = arith.constant 0 : index
    %c0_27 = arith.constant 0 : index
    %c0_28 = arith.constant 0 : index
    %81 = vector.load %arg4[%c0_26, %c0_27, %c0_28] : memref<1x1x64xf32, #tpu.memory_space<vmem>>, vector<1x1x64xf32>
    %82 = arith.mulf %74, %74 : vector<8x8x64xf32>
    %cst_29 = arith.constant dense<0.000000e+00> : vector<64xf32>
    %83 = vector.multi_reduction <add>, %82, %cst_29 [0, 1] : vector<8x8x64xf32> to vector<64xf32>
    %84 = vector.shape_cast %83 : vector<64xf32> to vector<1x1x64xf32>
    %85 = arith.addf %81, %84 : vector<1x1x64xf32>
    %c0_30 = arith.constant 0 : index
    %c0_31 = arith.constant 0 : index
    %c0_32 = arith.constant 0 : index
    %86 = vector.load %arg4[%c0_30, %c0_31, %c0_32] : memref<1x1x64xf32, #tpu.memory_space<vmem>>, vector<1x1x64xf32>
    tpu.vector_store %arg4[%c0_30, %c0_31, %c0_32], %85 {strides = array<i32>} : memref<1x1x64xf32, #tpu.memory_space<vmem>>, vector<1x1x64xf32>,
    return
  }
  func.func @transform_0(%arg0: i32, %arg1: i32) -> (i32, i32, i32, i32) {
    %c0_i32 = arith.constant 0 : i32
    %0 = arith.subi %c0_i32, %arg1 : i32
    %c0_i32_0 = arith.constant 0 : i32
    %c0_i32_1 = arith.constant 0 : i32
    %c0_i32_2 = arith.constant 0 : i32
    return %arg0, %c0_i32_0, %0, %c0_i32_1 : i32, i32, i32, i32
  }
  func.func @transform_1(%arg0: i32, %arg1: i32) -> (i32, i32, i32) {
    %c0_i32 = arith.constant 0 : i32
    %c0_i32_0 = arith.constant 0 : i32
    %c0_i32_1 = arith.constant 0 : i32
    return %arg0, %c0_i32, %c0_i32_0 : i32, i32, i32
  }
  func.func @transform_2(%arg0: i32, %arg1: i32) -> (i32, i32, i32) {
    %c0_i32 = arith.constant 0 : i32
    %c0_i32_0 = arith.constant 0 : i32
    %c0_i32_1 = arith.constant 0 : i32
    return %arg0, %c0_i32, %c0_i32_0 : i32, i32, i32
  }
}

module attributes {stable_mosaic.version = 11 : i64} {
  func.func @_pool_norm_kernel(%arg0: i32, %arg1: i32, %arg2: memref<1x8x8x64xbf16, #tpu.memory_space<vmem>>, %arg3: memref<1x1x64xf32, #tpu.memory_space<vmem>>, %arg4: memref<1x1x64xf32, #tpu.memory_space<vmem>>, %arg5: memref<1x8x8x64xf32, #tpu.memory_space<vmem>>, %arg6: memref<8x1x64xf32, #tpu.memory_space<vmem>>) attributes {dimension_semantics = [#tpu.dimension_semantics<parallel>, #tpu.dimension_semantics<arbitrary>], iteration_bounds = array<i64: 2, 1>, scalar_prefetch = 0 : i64, scratch_operands = 1 : i64, tpu.core_type = #tpu.core_type<tc>, window_params = [{transform_indices = @transform_0, window_bounds = array<i64: 1, 8, 8, 64>}, {pipeline_mode = #tpu.pipeline_mode<synchronous>, transform_indices = @transform_1, window_bounds = array<i64: 1, 1, 64>}, {pipeline_mode = #tpu.pipeline_mode<synchronous>, transform_indices = @transform_2, window_bounds = array<i64: 1, 1, 64>}, {transform_indices = @transform_3, window_bounds = array<i64: 1, 8, 8, 64>}]} {
    %c0_i32 = arith.constant 0 : i32
    %0 = arith.cmpi eq, %arg1, %c0_i32 : i32
    %1 = arith.extui %0 : i1 to i32
    %c0_i32_0 = arith.constant 0 : i32
    %2 = arith.cmpi ne, %1, %c0_i32_0 : i32
    scf.if %2 {
      %cst_29 = arith.constant -3.40282347E+38 : f32
      %85 = vector.broadcast %cst_29 : f32 to vector<8x1x64xf32>
      %c0_30 = arith.constant 0 : index
      %c0_31 = arith.constant 0 : index
      %c0_32 = arith.constant 0 : index
      %86 = vector.load %arg6[%c0_30, %c0_31, %c0_32] : memref<8x1x64xf32, #tpu.memory_space<vmem>>, vector<8x1x64xf32>
      tpu.vector_store %arg6[%c0_30, %c0_31, %c0_32], %85 {strides = array<i32>} : memref<8x1x64xf32, #tpu.memory_space<vmem>>, vector<8x1x64xf32>,
    } else {
    }
    %c0 = arith.constant 0 : index
    %c0_1 = arith.constant 0 : index
    %c0_2 = arith.constant 0 : index
    %c0_3 = arith.constant 0 : index
    %3 = vector.load %arg2[%c0, %c0_1, %c0_2, %c0_3] : memref<1x8x8x64xbf16, #tpu.memory_space<vmem>>, vector<1x8x8x64xbf16>
    %4 = vector.shape_cast %3 : vector<1x8x8x64xbf16> to vector<8x8x64xbf16>
    %5 = arith.extf %4 : vector<8x8x64xbf16> to vector<8x8x64xf32>
    %c0_4 = arith.constant 0 : index
    %c0_5 = arith.constant 0 : index
    %c0_6 = arith.constant 0 : index
    %6 = vector.load %arg6[%c0_4, %c0_5, %c0_6] : memref<8x1x64xf32, #tpu.memory_space<vmem>>, vector<8x1x64xf32>
    %7 = tpu.iota {dimensions = array<i32: 0>} : vector<8x1x1xi32>
    %c7_i32 = arith.constant 7 : i32
    %8 = vector.broadcast %c7_i32 : i32 to vector<8x1x1xi32>
    %9 = arith.cmpi slt, %7, %8 : vector<8x1x1xi32>
    %10 = vector.extract_strided_slice %5 {offsets = [1, 0, 0], sizes = [7, 8, 64], strides = [1, 1, 1]} : vector<8x8x64xf32> to vector<7x8x64xf32>
    %11 = vector.extract_strided_slice %5 {offsets = [0, 0, 0], sizes = [1, 8, 64], strides = [1, 1, 1]} : vector<8x8x64xf32> to vector<1x8x64xf32>
    %12 = tpu.concatenate %10, %11 in 0 : vector<7x8x64xf32>, vector<1x8x64xf32> -> vector<8x8x64xf32>
    %cst = arith.constant -3.40282347E+38 : f32
    %13 = vector.shape_cast %9 : vector<8x1x1xi1> to vector<8x1x1xi1>
    %14 = vector.broadcast %13 : vector<8x1x1xi1> to vector<8x8x64xi1>
    %15 = vector.broadcast %cst : f32 to vector<8x8x64xf32>
    %16 = arith.select %14, %12, %15 : vector<8x8x64xi1>, vector<8x8x64xf32>
    %17 = arith.maximumf %5, %16 : vector<8x8x64xf32>
    %c6_i32 = arith.constant 6 : i32
    %18 = vector.broadcast %c6_i32 : i32 to vector<8x1x1xi32>
    %19 = arith.cmpi slt, %7, %18 : vector<8x1x1xi32>
    %20 = vector.extract_strided_slice %17 {offsets = [2, 0, 0], sizes = [6, 8, 64], strides = [1, 1, 1]} : vector<8x8x64xf32> to vector<6x8x64xf32>
    %21 = vector.extract_strided_slice %17 {offsets = [0, 0, 0], sizes = [2, 8, 64], strides = [1, 1, 1]} : vector<8x8x64xf32> to vector<2x8x64xf32>
    %22 = tpu.concatenate %20, %21 in 0 : vector<6x8x64xf32>, vector<2x8x64xf32> -> vector<8x8x64xf32>
    %cst_7 = arith.constant -3.40282347E+38 : f32
    %23 = vector.shape_cast %19 : vector<8x1x1xi1> to vector<8x1x1xi1>
    %24 = vector.broadcast %23 : vector<8x1x1xi1> to vector<8x8x64xi1>
    %25 = vector.broadcast %cst_7 : f32 to vector<8x8x64xf32>
    %26 = arith.select %24, %22, %25 : vector<8x8x64xi1>, vector<8x8x64xf32>
    %27 = arith.maximumf %17, %26 : vector<8x8x64xf32>
    %c4_i32 = arith.constant 4 : i32
    %28 = vector.broadcast %c4_i32 : i32 to vector<8x1x1xi32>
    %29 = arith.cmpi slt, %7, %28 : vector<8x1x1xi32>
    %30 = vector.extract_strided_slice %27 {offsets = [4, 0, 0], sizes = [4, 8, 64], strides = [1, 1, 1]} : vector<8x8x64xf32> to vector<4x8x64xf32>
    %31 = vector.extract_strided_slice %27 {offsets = [0, 0, 0], sizes = [4, 8, 64], strides = [1, 1, 1]} : vector<8x8x64xf32> to vector<4x8x64xf32>
    %32 = tpu.concatenate %30, %31 in 0 : vector<4x8x64xf32>, vector<4x8x64xf32> -> vector<8x8x64xf32>
    %cst_8 = arith.constant -3.40282347E+38 : f32
    %33 = vector.shape_cast %29 : vector<8x1x1xi1> to vector<8x1x1xi1>
    %34 = vector.broadcast %33 : vector<8x1x1xi1> to vector<8x8x64xi1>
    %35 = vector.broadcast %cst_8 : f32 to vector<8x8x64xf32>
    %36 = arith.select %34, %32, %35 : vector<8x8x64xi1>, vector<8x8x64xf32>
    %37 = arith.maximumf %27, %36 : vector<8x8x64xf32>
    %38 = tpu.iota {dimensions = array<i32: 1>} : vector<1x8x1xi32>
    %c7_i32_9 = arith.constant 7 : i32
    %39 = vector.broadcast %c7_i32_9 : i32 to vector<1x8x1xi32>
    %40 = arith.cmpi slt, %38, %39 : vector<1x8x1xi32>
    %41 = vector.extract_strided_slice %5 {offsets = [0, 1, 0], sizes = [8, 7, 64], strides = [1, 1, 1]} : vector<8x8x64xf32> to vector<8x7x64xf32>
    %42 = vector.extract_strided_slice %5 {offsets = [0, 0, 0], sizes = [8, 1, 64], strides = [1, 1, 1]} : vector<8x8x64xf32> to vector<8x1x64xf32>
    %43 = tpu.concatenate %41, %42 in 1 : vector<8x7x64xf32>, vector<8x1x64xf32> -> vector<8x8x64xf32>
    %cst_10 = arith.constant -3.40282347E+38 : f32
    %44 = vector.shape_cast %40 : vector<1x8x1xi1> to vector<1x8x1xi1>
    %45 = vector.broadcast %44 : vector<1x8x1xi1> to vector<8x8x64xi1>
    %46 = vector.broadcast %cst_10 : f32 to vector<8x8x64xf32>
    %47 = arith.select %45, %43, %46 : vector<8x8x64xi1>, vector<8x8x64xf32>
    %48 = arith.maximumf %5, %47 : vector<8x8x64xf32>
    %c6_i32_11 = arith.constant 6 : i32
    %49 = vector.broadcast %c6_i32_11 : i32 to vector<1x8x1xi32>
    %50 = arith.cmpi slt, %38, %49 : vector<1x8x1xi32>
    %51 = vector.extract_strided_slice %48 {offsets = [0, 2, 0], sizes = [8, 6, 64], strides = [1, 1, 1]} : vector<8x8x64xf32> to vector<8x6x64xf32>
    %52 = vector.extract_strided_slice %48 {offsets = [0, 0, 0], sizes = [8, 2, 64], strides = [1, 1, 1]} : vector<8x8x64xf32> to vector<8x2x64xf32>
    %53 = tpu.concatenate %51, %52 in 1 : vector<8x6x64xf32>, vector<8x2x64xf32> -> vector<8x8x64xf32>
    %cst_12 = arith.constant -3.40282347E+38 : f32
    %54 = vector.shape_cast %50 : vector<1x8x1xi1> to vector<1x8x1xi1>
    %55 = vector.broadcast %54 : vector<1x8x1xi1> to vector<8x8x64xi1>
    %56 = vector.broadcast %cst_12 : f32 to vector<8x8x64xf32>
    %57 = arith.select %55, %53, %56 : vector<8x8x64xi1>, vector<8x8x64xf32>
    %58 = arith.maximumf %48, %57 : vector<8x8x64xf32>
    %c4_i32_13 = arith.constant 4 : i32
    %59 = vector.broadcast %c4_i32_13 : i32 to vector<1x8x1xi32>
    %60 = arith.cmpi slt, %38, %59 : vector<1x8x1xi32>
    %61 = vector.extract_strided_slice %58 {offsets = [0, 4, 0], sizes = [8, 4, 64], strides = [1, 1, 1]} : vector<8x8x64xf32> to vector<8x4x64xf32>
    %62 = vector.extract_strided_slice %58 {offsets = [0, 0, 0], sizes = [8, 4, 64], strides = [1, 1, 1]} : vector<8x8x64xf32> to vector<8x4x64xf32>
    %63 = tpu.concatenate %61, %62 in 1 : vector<8x4x64xf32>, vector<8x4x64xf32> -> vector<8x8x64xf32>
    %cst_14 = arith.constant -3.40282347E+38 : f32
    %64 = vector.shape_cast %60 : vector<1x8x1xi1> to vector<1x8x1xi1>
    %65 = vector.broadcast %64 : vector<1x8x1xi1> to vector<8x8x64xi1>
    %66 = vector.broadcast %cst_14 : f32 to vector<8x8x64xf32>
    %67 = arith.select %65, %63, %66 : vector<8x8x64xi1>, vector<8x8x64xf32>
    %68 = arith.maximumf %58, %67 : vector<8x8x64xf32>
    %69 = vector.broadcast %6 : vector<8x1x64xf32> to vector<8x8x64xf32>
    %70 = arith.maximumf %68, %69 : vector<8x8x64xf32>
    %71 = vector.extract_strided_slice %70 {offsets = [0, 0, 0], sizes = [8, 1, 64], strides = [1, 1, 1]} : vector<8x8x64xf32> to vector<8x1x64xf32>
    %72 = arith.addf %37, %70 : vector<8x8x64xf32>
    %cst_15 = arith.constant 0.000000e+00 : f32
    %73 = vector.broadcast %cst_15 : f32 to vector<8x8x64xf32>
    %74 = arith.maximumf %72, %73 : vector<8x8x64xf32>
    %c0_16 = arith.constant 0 : index
    %c0_17 = arith.constant 0 : index
    %c0_18 = arith.constant 0 : index
    %75 = vector.load %arg6[%c0_16, %c0_17, %c0_18] : memref<8x1x64xf32, #tpu.memory_space<vmem>>, vector<8x1x64xf32>
    tpu.vector_store %arg6[%c0_16, %c0_17, %c0_18], %71 {strides = array<i32>} : memref<8x1x64xf32, #tpu.memory_space<vmem>>, vector<8x1x64xf32>,
    %c0_19 = arith.constant 0 : index
    %c0_20 = arith.constant 0 : index
    %c0_21 = arith.constant 0 : index
    %76 = vector.load %arg3[%c0_19, %c0_20, %c0_21] : memref<1x1x64xf32, #tpu.memory_space<vmem>>, vector<1x1x64xf32>
    %77 = vector.broadcast %76 : vector<1x1x64xf32> to vector<8x8x64xf32>
    %78 = arith.mulf %74, %77 : vector<8x8x64xf32>
    %c0_22 = arith.constant 0 : index
    %c0_23 = arith.constant 0 : index
    %c0_24 = arith.constant 0 : index
    %79 = vector.load %arg4[%c0_22, %c0_23, %c0_24] : memref<1x1x64xf32, #tpu.memory_space<vmem>>, vector<1x1x64xf32>
    %80 = vector.broadcast %79 : vector<1x1x64xf32> to vector<8x8x64xf32>
    %81 = arith.addf %78, %80 : vector<8x8x64xf32>
    %c0_25 = arith.constant 0 : index
    %c0_26 = arith.constant 0 : index
    %c0_27 = arith.constant 0 : index
    %c0_28 = arith.constant 0 : index
    %82 = vector.load %arg5[%c0_25, %c0_26, %c0_27, %c0_28] : memref<1x8x8x64xf32, #tpu.memory_space<vmem>>, vector<1x8x8x64xf32>
    %83 = vector.shape_cast %82 : vector<1x8x8x64xf32> to vector<8x8x64xf32>
    %84 = vector.shape_cast %81 : vector<8x8x64xf32> to vector<1x8x8x64xf32>
    tpu.vector_store %arg5[%c0_25, %c0_26, %c0_27, %c0_28], %84 {strides = array<i32>} : memref<1x8x8x64xf32, #tpu.memory_space<vmem>>, vector<1x8x8x64xf32>,
    return
  }
  func.func @transform_0(%arg0: i32, %arg1: i32) -> (i32, i32, i32, i32) {
    %c0_i32 = arith.constant 0 : i32
    %0 = arith.subi %c0_i32, %arg1 : i32
    %c0_i32_0 = arith.constant 0 : i32
    %c0_i32_1 = arith.constant 0 : i32
    %c0_i32_2 = arith.constant 0 : i32
    return %arg0, %c0_i32_0, %0, %c0_i32_1 : i32, i32, i32, i32
  }
  func.func @transform_1(%arg0: i32, %arg1: i32) -> (i32, i32, i32) {
    %c0_i32 = arith.constant 0 : i32
    %c0_i32_0 = arith.constant 0 : i32
    %c0_i32_1 = arith.constant 0 : i32
    %c0_i32_2 = arith.constant 0 : i32
    return %c0_i32, %c0_i32_0, %c0_i32_1 : i32, i32, i32
  }
  func.func @transform_2(%arg0: i32, %arg1: i32) -> (i32, i32, i32) {
    %c0_i32 = arith.constant 0 : i32
    %c0_i32_0 = arith.constant 0 : i32
    %c0_i32_1 = arith.constant 0 : i32
    %c0_i32_2 = arith.constant 0 : i32
    return %c0_i32, %c0_i32_0, %c0_i32_1 : i32, i32, i32
  }
  func.func @transform_3(%arg0: i32, %arg1: i32) -> (i32, i32, i32, i32) {
    %c0_i32 = arith.constant 0 : i32
    %0 = arith.subi %c0_i32, %arg1 : i32
    %c0_i32_0 = arith.constant 0 : i32
    %c0_i32_1 = arith.constant 0 : i32
    %c0_i32_2 = arith.constant 0 : i32
    return %arg0, %c0_i32_0, %0, %c0_i32_1 : i32, i32, i32, i32
  }
}

</mosaic_0001>

<llo_original>
// kernel: pool_model_forward.5
$region0: #{pool_model_forward.5}
  #allocation0 [shape = 'u32[]', space=smem, size = 0x4, offset = 0x4, fixed_abs, tag = 'smem constant byte address 0x4 - core index']
  #allocation1 [shape = 'u32[144,128]{1,0:T(1,128)}', space=vmem, size = 0x12000, scoped, tag = 'internal scratch']
  #allocation2 [shape = 'f32[8,1,64]{2,1,0:T(1,128)}', space=vmem, size = 0x1000, scoped, tag = 'scratch operand']
  %s0 = inlined_call_operand.vmem [shape: bf16[2,8,8,64], index: 0, kind: input, shape index: {}]
  %s1 = inlined_call_operand.vmem [shape: f32[1,1,64], index: 1, kind: input, shape index: {}]
  %s2 = inlined_call_operand.vmem [shape: f32[1,1,64], index: 2, kind: input, shape index: {}]
  %s3 = inlined_call_operand.hbm [shape: f32[2,8,8,64], index: 3, kind: output, shape index: {}]
  %s4 = sld [smem:[#allocation0]]
  $region49: #{pool_model_forward.5} parent=0
    _
  %s6 = ssub.s32 1, %s4
  %s7 = scalar_select 0, %s6, %s4
  $region1: #{pool_model_forward.5} parent=0
    #allocation3 [shape = 'u8[65536]{0}', space=vmem, size = 0x10000, scoped, tag = 'output window, operand 0']
    #allocation4 [shape = 's32[2]{0}', space=sflag, size = 0x8, scoped, tag = 'scoped memory for pool_model_forward.5']
    %8 = vsyncpa [#allocation4], 0
    %s9 = scalar_lea.sflag [#allocation4], 1
    %10 = vsyncpa %s9, 0
    loop: start=0, step=1, limit=4
    $region2: #{pool_model_forward.5} parent=1 // loop_pre_header
      _
    $region3: #{pool_model_forward.5} parent=1 // loop_header
      %s12 = sphi 0, %s16
      %p13 = scmp.ge.s32.totalorder %s12, 4
      %s19 = sphi 0, %s31
      %s20 = sphi 0, %s27
      %s21 = sphi 0, %s19
      %s22 = sphi 0, %s20
      %s23 = sphi 0, %s21
      %s24 = sphi 0, %s22
      %s38 = sphi 0, %s40
      %s41 = sphi 0, %s38
      %s42 = sphi 0, %s41
      %s58 = sphi 0, %s42
      %s62 = sphi 0, %s62
      %s64 = sphi 0, %s62
      %s65 = sphi 0, %s64
      %s79 = sphi 0, %s65
      %s83 = sphi 0, %s83
      %s85 = sphi 0, %s83
      %s86 = sphi 0, %s85
      %s100 = sphi 0, %s86
      %s110 = sphi 0, %s112
      %s113 = sphi 0, %s110
      %s114 = sphi 0, %s113
      %s130 = sphi 0, %s114
    $region4: #{pool_model_forward.5} parent=1 // loop_header_branch
      %15 = sbr.rel (%p13) target = $region8
    $region5: #{pool_model_forward.5} parent=1 // loop_body
      %s17 = ssub.s32 %s12, 1
      %s18 = ssub.s32 %s12, 2
      %s25 = sadd.s32 1, %s20
      %p26 = scmp.ge.s32.totalorder %s25, 1
      %s27 = scalar_select %p26, 0, %s25
      %s28 = sadd.s32 1, %s19
      %s29 = scalar_select %p26, %s28, %s19
      %p30 = scmp.ge.s32.totalorder %s29, 2
      %s31 = scalar_select %p30, 0, %s29
      %s32 = ssub.s32 0, %s20
      %s33 = ssub.s32 0, %s27
      %s34 = ssub.s32 %s19, %s31
      %s35 = ssub.s32 %s32, %s33
      %s36 = sor.u32 %s34, %s35
      %p37 = scmp.eq.s32.totalorder %s36, 0
      %s39 = sadd.s32 %s38, 1
      %s40 = scalar_select %p37, %s38, %s39
      %p43 = pneg %p37
      %p44 = scmp.eq.s32.totalorder %s12, 1
      %p45 = por %p43, %p44
      %p46 = scmp.ne.s32.totalorder %s38, %s41
      %p47 = scmp.eq.s32.totalorder %s12, 0
      %p48 = por %p46, %p47
      %p49 = scmp.ne.s32.totalorder %s38, %s41
      %p50 = scmp.eq.s32.totalorder %s17, 1
      %p51 = por %p49, %p50
      %p52 = scmp.ne.s32.totalorder %s41, %s42
      %p53 = scmp.eq.s32.totalorder %s17, 0
      %p54 = por %p52, %p53
      %p55 = scmp.ne.s32.totalorder %s41, %s42
      %p56 = scmp.eq.s32.totalorder %s18, 1
      %p57 = por %p55, %p56
      %p59 = scmp.ne.s32.totalorder %s42, %s58
      %p60 = scmp.eq.s32.totalorder %s18, 0
      %p61 = por %p59, %p60
      %s63 = sadd.s32 %s62, 1
      %p66 = scmp.eq.s32.totalorder %s12, 1
      %p67 = scmp.ne.s32.totalorder %s62, %s64
      %p68 = scmp.eq.s32.totalorder %s12, 0
      %p69 = por %p67, %p68
      %p70 = scmp.ne.s32.totalorder %s62, %s64
      %p71 = scmp.eq.s32.totalorder %s17, 1
      %p72 = por %p70, %p71
      %p73 = scmp.ne.s32.totalorder %s64, %s65
      %p74 = scmp.eq.s32.totalorder %s17, 0
      %p75 = por %p73, %p74
      %p76 = scmp.ne.s32.totalorder %s64, %s65
      %p77 = scmp.eq.s32.totalorder %s18, 1
      %p78 = por %p76, %p77
      %p80 = scmp.ne.s32.totalorder %s65, %s79
      %p81 = scmp.eq.s32.totalorder %s18, 0
      %p82 = por %p80, %p81
      %s84 = sadd.s32 %s83, 1
      %p87 = scmp.eq.s32.totalorder %s12, 1
      %p88 = scmp.ne.s32.totalorder %s83, %s85
      %p89 = scmp.eq.s32.totalorder %s12, 0
      %p90 = por %p88, %p89
      %p91 = scmp.ne.s32.totalorder %s83, %s85
      %p92 = scmp.eq.s32.totalorder %s17, 1
      %p93 = por %p91, %p92
      %p94 = scmp.ne.s32.totalorder %s85, %s86
      %p95 = scmp.eq.s32.totalorder %s17, 0
      %p96 = por %p94, %p95
      %p97 = scmp.ne.s32.totalorder %s85, %s86
      %p98 = scmp.eq.s32.totalorder %s18, 1
      %p99 = por %p97, %p98
      %p101 = scmp.ne.s32.totalorder %s86, %s100
      %p102 = scmp.eq.s32.totalorder %s18, 0
      %p103 = por %p101, %p102
      %s104 = ssub.s32 0, %s20
      %s105 = ssub.s32 0, %s27
      %s106 = ssub.s32 %s19, %s31
      %s107 = ssub.s32 %s104, %s105
      %s108 = sor.u32 %s106, %s107
      %p109 = scmp.eq.s32.totalorder %s108, 0
      %s111 = sadd.s32 %s110, 1
      %s112 = scalar_select %p109, %s110, %s111
      %p115 = pneg %p109
      %p116 = scmp.eq.s32.totalorder %s12, 1
      %p117 = por %p115, %p116
      %p118 = scmp.ne.s32.totalorder %s110, %s113
      %p119 = scmp.eq.s32.totalorder %s12, 0
      %p120 = por %p118, %p119
      %p121 = scmp.ne.s32.totalorder %s110, %s113
      %p122 = scmp.eq.s32.totalorder %s17, 1
      %p123 = por %p121, %p122
      %p124 = scmp.ne.s32.totalorder %s113, %s114
      %p125 = scmp.eq.s32.totalorder %s17, 0
      %p126 = por %p124, %p125
      %p127 = scmp.ne.s32.totalorder %s113, %s114
      %p128 = scmp.eq.s32.totalorder %s18, 1
      %p129 = por %p127, %p128
      %p131 = scmp.ne.s32.totalorder %s114, %s130
      %p132 = scmp.eq.s32.totalorder %s18, 0
      %p133 = por %p131, %p132
      %p134 = scmp.le.s32.totalorder 1, %s12
      %p135 = scmp.lt.s32.totalorder %s12, 3
      %p136 = pnand %p134, %p135
      %p137 = pneg %p136
      // Predicated region
      $region9: #{pool_model_forward.5} parent=5 // pred_check
        _
      $region10: #{pool_model_forward.5} parent=5 // pred_check_branch
        %139 = sbr.rel (%p136) target = $region12
      $region11: #{pool_model_forward.5} parent=5 // pred_region
        %s140 = ssub.s32 %s12, 1
        // Predicated region
        $region13: #{pool_model_forward.5} parent=11 // pred_check
          %p141 = pneg %p75
        $region14: #{pool_model_forward.5} parent=11 // pred_check_branch
          %143 = sbr.rel (%p141) target = $region16
        $region15: #{pool_model_forward.5} parent=11 // pred_region
          _
        $region16: #{pool_model_forward.5} parent=11 // pred_fallthru
          _
        // Predicated region
        $region17: #{pool_model_forward.5} parent=11 // pred_check
          %p144 = pneg %p96
        $region18: #{pool_model_forward.5} parent=11 // pred_check_branch
          %146 = sbr.rel (%p144) target = $region20
        $region19: #{pool_model_forward.5} parent=11 // pred_region
          _
        $region20: #{pool_model_forward.5} parent=11 // pred_fallthru
          _
      $region12: #{pool_model_forward.5} parent=5 // pred_fallthru
        _
      %p147 = scmp.lt.s32.totalorder %s12, 2
      // Predicated region
      $region21: #{pool_model_forward.5} parent=5 // pred_check
        %p148 = pneg %p147
      $region22: #{pool_model_forward.5} parent=5 // pred_check_branch
        %150 = sbr.rel (%p148) target = $region24
      $region23: #{pool_model_forward.5} parent=5 // pred_region
        // Predicated region
        $region25: #{pool_model_forward.5} parent=23 // pred_check
          %p151 = pneg %p48
        $region26: #{pool_model_forward.5} parent=23 // pred_check_branch
          %153 = sbr.rel (%p151) target = $region28
        $region27: #{pool_model_forward.5} parent=23 // pred_region
          %s154 = ssub.s32 0, %s20
          %p155 = scmp.lt.s32.totalorder %s19, 1
          %s156 = scalar_select %p155, %s19, 1
          %p157 = scmp.lt.s32.totalorder %s154, 0
          %s158 = scalar_select %p157, %s154, 0
          %s159 = smul.addr %s156, 8
          %s160 = sadd.s32 %s158, %s159
          %s161 = smul.addr %s160, 4
          %s162 = scalar_lea.vmem %s0, %s161
          %s163 = ssub.s32 0, %s20
        $region28: #{pool_model_forward.5} parent=23 // pred_fallthru
          _
      $region24: #{pool_model_forward.5} parent=5 // pred_fallthru
        _
      %p164 = scmp.le.s32.totalorder 1, %s12
      %p165 = scmp.lt.s32.totalorder %s12, 3
      %p166 = pnand %p164, %p165
      %p167 = pneg %p166
      // Predicated region
      $region29: #{pool_model_forward.5} parent=5 // pred_check
        _
      $region30: #{pool_model_forward.5} parent=5 // pred_check_branch
        %169 = sbr.rel (%p166) target = $region32
      $region31: #{pool_model_forward.5} parent=5 // pred_region
        %s170 = ssub.s32 %s12, 1
        %s171 = ssub.s32 0, %s22
        %p172 = scmp.lt.s32.totalorder %s21, 1
        %s173 = scalar_select %p172, %s21, 1
        %p174 = scmp.lt.s32.totalorder %s171, 0
        %s175 = scalar_select %p174, %s171, 0
        %s176 = smul.addr %s173, 8
        %s177 = sadd.s32 %s175, %s176
        %s178 = smul.addr %s177, 4
        %s179 = scalar_lea.vmem %s0, %s178
        %p180 = pneg %p54
        %p181 = pneg %p51
        %p182 = pneg %p75
        %p183 = pneg %p72
        %p184 = pneg %p96
        %p185 = pneg %p93
        %p186 = pneg %p126
        %p187 = pneg %p123
        %s188 = sand.u32 %s113, 1
        %s189 = scalar_lea.sflag [#allocation4], %s188
        %s190 = sand.u32 %s113, 1
        %s191 = smul.addr %s190, 64
        %s192 = scalar_lea.vmem [#allocation3], %s191
        %s193 = ssub.s32 0, %s22
        %p194 = scmp.lt.s32.totalorder %s21, 1
        %s195 = scalar_select %p194, %s21, 1
        %p196 = scmp.lt.s32.totalorder %s193, 0
        %s197 = scalar_select %p196, %s193, 0
        %s198 = smul.addr %s195, 8
        %s199 = sadd.s32 %s197, %s198
        %s200 = smul.addr %s199, 4
        %s201 = scalar_lea.vmem %s0, %s200
        %s202 = ssub.s32 0, %s22
        %s203 = ssub.s32 0, %s22
        %p204 = scmp.eq.s32.totalorder %s22, 0
        // Predicated region
        $region33: #{pool_model_forward.5} parent=31 // pred_check
          %p205 = pneg %p204
        $region34: #{pool_model_forward.5} parent=31 // pred_check_branch
          %207 = sbr.rel (%p205) target = $region36
        $region35: #{pool_model_forward.5} parent=31 // pred_region
          %vm208 = vcmask 516096
          %209 = vst.msk [vmem:[#allocation2] sm:$0x1] %vm208, -3.4028235e+38
          %210 = vst.msk [vmem:[#allocation2 + $0x1] sm:$0x1] %vm208, -3.4028235e+38
          %211 = vst.msk [vmem:[#allocation2 + $0x2] sm:$0x1] %vm208, -3.4028235e+38
          %212 = vst.msk [vmem:[#allocation2 + $0x3] sm:$0x1] %vm208, -3.4028235e+38
          %213 = vst.msk [vmem:[#allocation2 + $0x4] sm:$0x1] %vm208, -3.4028235e+38
          %214 = vst.msk [vmem:[#allocation2 + $0x5] sm:$0x1] %vm208, -3.4028235e+38
          %215 = vst.msk [vmem:[#allocation2 + $0x6] sm:$0x1] %vm208, -3.4028235e+38
          %216 = vst.msk [vmem:[#allocation2 + $0x7] sm:$0x1] %vm208, -3.4028235e+38
        $region36: #{pool_model_forward.5} parent=31 // pred_fallthru
          _
        %v217 = vld [vmem:[%s201] sm:$0xf]
        %v218 = vld [vmem:[%s201 + $0x4] sm:$0xf]
        %v219 = vld [vmem:[%s201 + $0x8] sm:$0xf]
        %v220 = vld [vmem:[%s201 + $0xc] sm:$0xf]
        %v221 = vld [vmem:[%s201 + $0x10] sm:$0xf]
        %v222 = vld [vmem:[%s201 + $0x14] sm:$0xf]
        %v223 = vld [vmem:[%s201 + $0x18] sm:$0xf]
        %v224 = vld [vmem:[%s201 + $0x1c] sm:$0xf]
        %v225 = vunpack.c.l.bf16 %v217
        %v226 = vunpack.c.l.bf16 %v218
        %v227 = vunpack.c.l.bf16 %v219
        %v228 = vunpack.c.l.bf16 %v220
        %v229 = vunpack.c.l.bf16 %v221
        %v230 = vunpack.c.l.bf16 %v222
        %v231 = vunpack.c.l.bf16 %v223
        %v232 = vunpack.c.l.bf16 %v224
        %v233 = vld [vmem:[#allocation2] sm:$0x1]
        %v234 = vld [vmem:[#allocation2 + $0x1] sm:$0x1]
        %v235 = vld [vmem:[#allocation2 + $0x2] sm:$0x1]
        %v236 = vld [vmem:[#allocation2 + $0x3] sm:$0x1]
        %v237 = vld [vmem:[#allocation2 + $0x4] sm:$0x1]
        %v238 = vld [vmem:[#allocation2 + $0x5] sm:$0x1]
        %v239 = vld [vmem:[#allocation2 + $0x6] sm:$0x1]
        %v240 = vld [vmem:[#allocation2 + $0x7] sm:$0x1]
        %v241 = vsel 1, %v226, -3.4028235e+38
        %v242 = vsel 1, %v227, -3.4028235e+38
        %v243 = vsel 1, %v228, -3.4028235e+38
        %v244 = vsel 1, %v229, -3.4028235e+38
        %v245 = vsel 1, %v230, -3.4028235e+38
        %v246 = vsel 1, %v231, -3.4028235e+38
        %v247 = vsel 1, %v232, -3.4028235e+38
        %v248 = vsel 0, %v225, -3.4028235e+38
        %v249 = vmax.f32 %v225, %v241
        %v250 = vmax.f32 %v226, %v242
        %v251 = vmax.f32 %v227, %v243
        %v252 = vmax.f32 %v228, %v244
        %v253 = vmax.f32 %v229, %v245
        %v254 = vmax.f32 %v230, %v246
        %v255 = vmax.f32 %v231, %v247
        %v256 = vmax.f32 %v232, %v248
        %v257 = vsel 1, %v251, -3.4028235e+38
        %v258 = vsel 1, %v252, -3.4028235e+38
        %v259 = vsel 1, %v253, -3.4028235e+38
        %v260 = vsel 1, %v254, -3.4028235e+38
        %v261 = vsel 1, %v255, -3.4028235e+38
        %v262 = vsel 1, %v256, -3.4028235e+38
        %v263 = vsel 0, %v249, -3.4028235e+38
        %v264 = vsel 0, %v250, -3.4028235e+38
        %v265 = vmax.f32 %v249, %v257
        %v266 = vmax.f32 %v250, %v258
        %v267 = vmax.f32 %v251, %v259
        %v268 = vmax.f32 %v252, %v260
        %v269 = vmax.f32 %v253, %v261
        %v270 = vmax.f32 %v254, %v262
        %v271 = vmax.f32 %v255, %v263
        %v272 = vmax.f32 %v256, %v264
        %v273 = vsel 1, %v269, -3.4028235e+38
        %v274 = vsel 1, %v270, -3.4028235e+38
        %v275 = vsel 1, %v271, -3.4028235e+38
        %v276 = vsel 1, %v272, -3.4028235e+38
        %v277 = vsel 0, %v265, -3.4028235e+38
        %v278 = vsel 0, %v266, -3.4028235e+38
        %v279 = vsel 0, %v267, -3.4028235e+38
        %v280 = vsel 0, %v268, -3.4028235e+38
        %v281 = vmax.f32 %v265, %v273
        %v282 = vmax.f32 %v266, %v274
        %v283 = vmax.f32 %v267, %v275
        %v284 = vmax.f32 %v268, %v276
        %v285 = vmax.f32 %v269, %v277
        %v286 = vmax.f32 %v270, %v278
        %v287 = vmax.f32 %v271, %v279
        %v288 = vmax.f32 %v272, %v280
        %v289 = vlaneseq
        %v290 = vshrl.u32 %v289, 7
        %vm291 = vcmp.lt.s32.totalorder %v290, 7
        %v300 = vrot.slane %v225, 1
        %v301 = vrot.slane %v226, 1
        %v302 = vrot.slane %v227, 1
        %v303 = vrot.slane %v228, 1
        %v304 = vrot.slane %v229, 1
        %v305 = vrot.slane %v230, 1
        %v306 = vrot.slane %v231, 1
        %v307 = vrot.slane %v232, 1
        %vm316 = vcmask 1046528
        %v317 = vsel %vm316, %v300, %v300
        %v318 = vsel %vm316, %v301, %v301
        %v319 = vsel %vm316, %v302, %v302
        %v320 = vsel %vm316, %v303, %v303
        %v321 = vsel %vm316, %v304, %v304
        %v322 = vsel %vm316, %v305, %v305
        %v323 = vsel %vm316, %v306, %v306
        %v324 = vsel %vm316, %v307, %v307
        %v325 = vsel %vm291, 1, 0
        %vm326 = vcmp.eq.s32.totalorder %v325, 1
        %v327 = vsel %vm326, %v317, -3.4028235e+38
        %v328 = vsel %vm326, %v318, -3.4028235e+38
        %v329 = vsel %vm326, %v319, -3.4028235e+38
        %v330 = vsel %vm326, %v320, -3.4028235e+38
        %v331 = vsel %vm326, %v321, -3.4028235e+38
        %v332 = vsel %vm326, %v322, -3.4028235e+38
        %v333 = vsel %vm326, %v323, -3.4028235e+38
        %v334 = vsel %vm326, %v324, -3.4028235e+38
        %v335 = vmax.f32 %v225, %v327
        %v336 = vmax.f32 %v226, %v328
        %v337 = vmax.f32 %v227, %v329
        %v338 = vmax.f32 %v228, %v330
        %v339 = vmax.f32 %v229, %v331
        %v340 = vmax.f32 %v230, %v332
        %v341 = vmax.f32 %v231, %v333
        %v342 = vmax.f32 %v232, %v334
        %vm343 = vcmp.lt.s32.totalorder %v290, 6
        %v352 = vrot.slane %v335, 2
        %v353 = vrot.slane %v336, 2
        %v354 = vrot.slane %v337, 2
        %v355 = vrot.slane %v338, 2
        %v356 = vrot.slane %v339, 2
        %v357 = vrot.slane %v340, 2
        %v358 = vrot.slane %v341, 2
        %v359 = vrot.slane %v342, 2
        %vm368 = vcmask 1045504
        %v369 = vsel %vm368, %v352, %v352
        %v370 = vsel %vm368, %v353, %v353
        %v371 = vsel %vm368, %v354, %v354
        %v372 = vsel %vm368, %v355, %v355
        %v373 = vsel %vm368, %v356, %v356
        %v374 = vsel %vm368, %v357, %v357
        %v375 = vsel %vm368, %v358, %v358
        %v376 = vsel %vm368, %v359, %v359
        %v377 = vsel %vm343, 1, 0
        %vm378 = vcmp.eq.s32.totalorder %v377, 1
        %v379 = vsel %vm378, %v369, -3.4028235e+38
        %v380 = vsel %vm378, %v370, -3.4028235e+38
        %v381 = vsel %vm378, %v371, -3.4028235e+38
        %v382 = vsel %vm378, %v372, -3.4028235e+38
        %v383 = vsel %vm378, %v373, -3.4028235e+38
        %v384 = vsel %vm378, %v374, -3.4028235e+38
        %v385 = vsel %vm378, %v375, -3.4028235e+38
        %v386 = vsel %vm378, %v376, -3.4028235e+38
        %v387 = vmax.f32 %v335, %v379
        %v388 = vmax.f32 %v336, %v380
        %v389 = vmax.f32 %v337, %v381
        %v390 = vmax.f32 %v338, %v382
        %v391 = vmax.f32 %v339, %v383
        %v392 = vmax.f32 %v340, %v384
        %v393 = vmax.f32 %v341, %v385
        %v394 = vmax.f32 %v342, %v386
        %vm395 = vcmp.lt.s32.totalorder %v290, 4
        %v404 = vrot.slane %v387, 4
        %v405 = vrot.slane %v388, 4
        %v406 = vrot.slane %v389, 4
        %v407 = vrot.slane %v390, 4
        %v408 = vrot.slane %v391, 4
        %v409 = vrot.slane %v392, 4
        %v410 = vrot.slane %v393, 4
        %v411 = vrot.slane %v394, 4
        %vm420 = vcmask 1043456
        %v421 = vsel %vm420, %v404, %v404
        %v422 = vsel %vm420, %v405, %v405
        %v423 = vsel %vm420, %v406, %v406
        %v424 = vsel %vm420, %v407, %v407
        %v425 = vsel %vm420, %v408, %v408
        %v426 = vsel %vm420, %v409, %v409
        %v427 = vsel %vm420, %v410, %v410
        %v428 = vsel %vm420, %v411, %v411
        %v429 = vsel %vm395, 1, 0
        %vm430 = vcmp.eq.s32.totalorder %v429, 1
        %v431 = vsel %vm430, %v421, -3.4028235e+38
        %v432 = vsel %vm430, %v422, -3.4028235e+38
        %v433 = vsel %vm430, %v423, -3.4028235e+38
        %v434 = vsel %vm430, %v424, -3.4028235e+38
        %v435 = vsel %vm430, %v425, -3.4028235e+38
        %v436 = vsel %vm430, %v426, -3.4028235e+38
        %v437 = vsel %vm430, %v427, -3.4028235e+38
        %v438 = vsel %vm430, %v428, -3.4028235e+38
        %v439 = vmax.f32 %v387, %v431
        %v440 = vmax.f32 %v388, %v432
        %v441 = vmax.f32 %v389, %v433
        %v442 = vmax.f32 %v390, %v434
        %v443 = vmax.f32 %v391, %v435
        %v444 = vmax.f32 %v392, %v436
        %v445 = vmax.f32 %v393, %v437
        %v446 = vmax.f32 %v394, %v438
        %v455 = vlaneseq
        %v456 = vshrl.u32 %v455, 7
        %v457 = vsub.s32 0, %v456
        %v458 = vrot.slane %v233, %v457
        %v459 = vlaneseq
        %v460 = vshrl.u32 %v459, 7
        %v461 = vsub.s32 0, %v460
        %v462 = vrot.slane %v234, %v461
        %v463 = vlaneseq
        %v464 = vshrl.u32 %v463, 7
        %v465 = vsub.s32 0, %v464
        %v466 = vrot.slane %v235, %v465
        %v467 = vlaneseq
        %v468 = vshrl.u32 %v467, 7
        %v469 = vsub.s32 0, %v468
        %v470 = vrot.slane %v236, %v469
        %v471 = vlaneseq
        %v472 = vshrl.u32 %v471, 7
        %v473 = vsub.s32 0, %v472
        %v474 = vrot.slane %v237, %v473
        %v475 = vlaneseq
        %v476 = vshrl.u32 %v475, 7
        %v477 = vsub.s32 0, %v476
        %v478 = vrot.slane %v238, %v477
        %v479 = vlaneseq
        %v480 = vshrl.u32 %v479, 7
        %v481 = vsub.s32 0, %v480
        %v482 = vrot.slane %v239, %v481
        %v483 = vlaneseq
        %v484 = vshrl.u32 %v483, 7
        %v485 = vsub.s32 0, %v484
        %v486 = vrot.slane %v240, %v485
        %v495 = vmax.f32 %v439, %v458
        %v496 = vmax.f32 %v440, %v462
        %v497 = vmax.f32 %v441, %v466
        %v498 = vmax.f32 %v442, %v470
        %v499 = vmax.f32 %v443, %v474
        %v500 = vmax.f32 %v444, %v478
        %v501 = vmax.f32 %v445, %v482
        %v502 = vmax.f32 %v446, %v486
        %v503 = vadd.f32 %v281, %v495
        %v504 = vadd.f32 %v282, %v496
        %v505 = vadd.f32 %v283, %v497
        %v506 = vadd.f32 %v284, %v498
        %v507 = vadd.f32 %v285, %v499
        %v508 = vadd.f32 %v286, %v500
        %v509 = vadd.f32 %v287, %v501
        %v510 = vadd.f32 %v288, %v502
        %v511 = vmax.f32 %v503, 0.0
        %v512 = vmax.f32 %v504, 0.0
        %v513 = vmax.f32 %v505, 0.0
        %v514 = vmax.f32 %v506, 0.0
        %v515 = vmax.f32 %v507, 0.0
        %v516 = vmax.f32 %v508, 0.0
        %v517 = vmax.f32 %v509, 0.0
        %v518 = vmax.f32 %v510, 0.0
        %vm519 = vcmask 516096
        %520 = vst.msk [vmem:[#allocation2] sm:$0x1] %vm519, %v495
        %521 = vst.msk [vmem:[#allocation2 + $0x1] sm:$0x1] %vm519, %v496
        %522 = vst.msk [vmem:[#allocation2 + $0x2] sm:$0x1] %vm519, %v497
        %523 = vst.msk [vmem:[#allocation2 + $0x3] sm:$0x1] %vm519, %v498
        %524 = vst.msk [vmem:[#allocation2 + $0x4] sm:$0x1] %vm519, %v499
        %525 = vst.msk [vmem:[#allocation2 + $0x5] sm:$0x1] %vm519, %v500
        %526 = vst.msk [vmem:[#allocation2 + $0x6] sm:$0x1] %vm519, %v501
        %527 = vst.msk [vmem:[#allocation2 + $0x7] sm:$0x1] %vm519, %v502
        %v528 = vld [vmem:[%s1] sm:$0x1]
        %v530 = vlaneseq
        %v531 = vshrl.u32 %v530, 7
        %v532 = vsub.s32 0, %v531
        %v533 = vrot.slane %v528, %v532
        %v535 = vmul.f32 %v511, %v533
        %v536 = vmul.f32 %v512, %v533
        %v537 = vmul.f32 %v513, %v533
        %v538 = vmul.f32 %v514, %v533
        %v539 = vmul.f32 %v515, %v533
        %v540 = vmul.f32 %v516, %v533
        %v541 = vmul.f32 %v517, %v533
        %v542 = vmul.f32 %v518, %v533
        %v543 = vld [vmem:[%s2] sm:$0x1]
        %v545 = vlaneseq
        %v546 = vshrl.u32 %v545, 7
        %v547 = vsub.s32 0, %v546
        %v548 = vrot.slane %v543, %v547
        %v550 = vadd.f32 %v535, %v548
        %v551 = vadd.f32 %v536, %v548
        %v552 = vadd.f32 %v537, %v548
        %v553 = vadd.f32 %v538, %v548
        %v554 = vadd.f32 %v539, %v548
        %v555 = vadd.f32 %v540, %v548
        %v556 = vadd.f32 %v541, %v548
        %v557 = vadd.f32 %v542, %v548
        %vm558 = vcmask 523264
        %559 = vst.msk [vmem:[%s192] sm:$0xff] %vm558, %v550
        %560 = vst.msk [vmem:[%s192 + $0x8] sm:$0xff] %vm558, %v551
        %561 = vst.msk [vmem:[%s192 + $0x10] sm:$0xff] %vm558, %v552
        %562 = vst.msk [vmem:[%s192 + $0x18] sm:$0xff] %vm558, %v553
        %563 = vst.msk [vmem:[%s192 + $0x20] sm:$0xff] %vm558, %v554
        %564 = vst.msk [vmem:[%s192 + $0x28] sm:$0xff] %vm558, %v555
        %565 = vst.msk [vmem:[%s192 + $0x30] sm:$0xff] %vm558, %v556
        %566 = vst.msk [vmem:[%s192 + $0x38] sm:$0xff] %vm558, %v557
        %s567 = sand.u32 %s113, 1
        %s568 = scalar_lea.sflag [#allocation4], %s567
        %s569 = sand.u32 %s113, 1
        %s570 = smul.addr %s569, 64
        %s571 = scalar_lea.vmem [#allocation3], %s570
        // Predicated region
        $region37: #{pool_model_forward.5} parent=31 // pred_check
          %p572 = pneg %p123
        $region38: #{pool_model_forward.5} parent=31 // pred_check_branch
          %574 = sbr.rel (%p572) target = $region40
        $region39: #{pool_model_forward.5} parent=31 // pred_region
          %s575 = ssub.s32 0, %s22
          %s577 = ssub.s32 1024, 1024
          %578 = vsyncadd %s568, %s577
          %s579 = smul.addr %s21, 8
          %s580 = sadd.s32 %s575, %s579
          %s581 = smul.addr %s580, 128
          %s582 = scalar_lea.hbm %s3, %s581
          %s583 = sshll.u32 %s571, 4
          %s584 = int_to_ptr.vmem [resolvable:$true] %s583
          %589 = dma.vmem_to_hbm [thread:$0]  %s584, 1024, %s582, %s568, 128, 128, 8
        $region40: #{pool_model_forward.5} parent=31 // pred_fallthru
          _
      $region32: #{pool_model_forward.5} parent=5 // pred_fallthru
        _
      %p590 = scmp.le.s32.totalorder 2, %s12
      // Predicated region
      $region41: #{pool_model_forward.5} parent=5 // pred_check
        %p591 = pneg %p590
      $region42: #{pool_model_forward.5} parent=5 // pred_check_branch
        %593 = sbr.rel (%p591) target = $region44
      $region43: #{pool_model_forward.5} parent=5 // pred_region
        %s594 = ssub.s32 %s12, 2
        // Predicated region
        $region45: #{pool_model_forward.5} parent=43 // pred_check
          %p595 = pneg %p129
        $region46: #{pool_model_forward.5} parent=43 // pred_check_branch
          %597 = sbr.rel (%p595) target = $region48
        $region47: #{pool_model_forward.5} parent=43 // pred_region
          %s598 = sand.u32 %s114, 1
          %s599 = scalar_lea.sflag [#allocation4], %s598
          %s600 = sand.u32 %s114, 1
          %s601 = smul.addr %s600, 64
          %s602 = scalar_lea.vmem [#allocation3], %s601
          %603 = dma.done %s599, 1024
        $region48: #{pool_model_forward.5} parent=43 // pred_fallthru
          _
      $region44: #{pool_model_forward.5} parent=5 // pred_fallthru
        _
    $region6: #{pool_model_forward.5} parent=1 // loop_footer
      %s16 = sadd.s32 1, %s12
    $region7: #{pool_model_forward.5} parent=1 // loop_footer_branch
      %11 = sbr.rel target = $region3
    $region8: #{pool_model_forward.5} parent=1 // loop_exit
      _
    %604 = vsyncpa [#allocation4], 1
    %s605 = scalar_lea.sflag [#allocation4], 1
    %606 = vsyncpa %s605, 1

// kernel: pool_model_forward.3
$region0: #{pool_model_forward.3}
  #allocation0 [shape = 'u32[]', space=smem, size = 0x4, offset = 0x4, fixed_abs, tag = 'smem constant byte address 0x4 - core index']
  #allocation1 [shape = 'u32[144,128]{1,0:T(1,128)}', space=vmem, size = 0x12000, scoped, tag = 'internal scratch']
  %s0 = inlined_call_operand.vmem [shape: bf16[128,160], index: 0, kind: input, shape index: {}]
  %s1 = inlined_call_operand.vmem [shape: bf16[160,64], index: 1, kind: input, shape index: {}]
  %s2 = inlined_call_operand.vmem [shape: bf16[128,64], index: 2, kind: output, shape index: {}]
  %s3 = sld [smem:[#allocation0]]
  $region18: #{pool_model_forward.3} parent=0
    _
  %s5 = ssub.s32 1, %s3
  %s6 = scalar_select 0, %s5, %s3
  // Predicated region
  $region2: #{pool_model_forward.3} parent=0 // pred_check
    _
  $region3: #{pool_model_forward.3} parent=0 // pred_check_branch
    %8 = sbr.rel (0) target = $region5
  $region4: #{pool_model_forward.3} parent=0 // pred_region
    _
  $region5: #{pool_model_forward.3} parent=0 // pred_fallthru
    _
  // Predicated region
  $region6: #{pool_model_forward.3} parent=0 // pred_check
    _
  $region7: #{pool_model_forward.3} parent=0 // pred_check_branch
    %10 = sbr.rel (0) target = $region9
  $region8: #{pool_model_forward.3} parent=0 // pred_region
    _
  $region9: #{pool_model_forward.3} parent=0 // pred_fallthru
    _
  %v12 = vld [vmem:[%s0] sm:$0xff]
  %v13 = vld [vmem:[%s0 + $0x8] sm:$0xff]
  %v14 = vld [vmem:[%s0 + $0x10] sm:$0xff]
  %v15 = vld [vmem:[%s0 + $0x18] sm:$0xff]
  %v16 = vld [vmem:[%s0 + $0x20] sm:$0xff]
  %v17 = vld [vmem:[%s0 + $0x28] sm:$0xff]
  %v18 = vld [vmem:[%s0 + $0x30] sm:$0xff]
  %v19 = vld [vmem:[%s0 + $0x38] sm:$0xff]
  %v20 = vld [vmem:[%s0 + $0x40] sm:$0xff]
  %v21 = vld [vmem:[%s0 + $0x48] sm:$0xff]
  %v22 = vld [vmem:[%s0 + $0x50] sm:$0xff]
  %v23 = vld [vmem:[%s0 + $0x58] sm:$0xff]
  %v24 = vld [vmem:[%s0 + $0x60] sm:$0xff]
  %v25 = vld [vmem:[%s0 + $0x68] sm:$0xff]
  %v26 = vld [vmem:[%s0 + $0x70] sm:$0xff]
  %v27 = vld [vmem:[%s0 + $0x78] sm:$0xff]
  %v28 = vld [vmem:[%s1] sm:$0xf]
  %v29 = vld [vmem:[%s1 + $0x4] sm:$0xf]
  %v30 = vld [vmem:[%s1 + $0x8] sm:$0xf]
  %v31 = vld [vmem:[%s1 + $0xc] sm:$0xf]
  %v32 = vld [vmem:[%s1 + $0x10] sm:$0xf]
  %v33 = vld [vmem:[%s1 + $0x14] sm:$0xf]
  %v34 = vld [vmem:[%s1 + $0x18] sm:$0xf]
  %v35 = vld [vmem:[%s1 + $0x1c] sm:$0xf]
  %v36 = vld [vmem:[%s1 + $0x20] sm:$0xf]
  %v37 = vld [vmem:[%s1 + $0x24] sm:$0xf]
  %v38 = vld [vmem:[%s1 + $0x28] sm:$0xf]
  %v39 = vld [vmem:[%s1 + $0x2c] sm:$0xf]
  %v40 = vld [vmem:[%s1 + $0x30] sm:$0xf]
  %v41 = vld [vmem:[%s1 + $0x34] sm:$0xf]
  %v42 = vld [vmem:[%s1 + $0x38] sm:$0xf]
  %v43 = vld [vmem:[%s1 + $0x3c] sm:$0xf]
  %v44 = vld [vmem:[%s1 + $0x40] sm:$0xf]
  %v45 = vld [vmem:[%s1 + $0x44] sm:$0xf]
  %v46 = vld [vmem:[%s1 + $0x48] sm:$0xf]
  %v47 = vld [vmem:[%s1 + $0x4c] sm:$0xf]
  %v64 = vunpack.c.l.b16 %v12
  %v65 = vunpack.c.h.b16 %v12
  %v66 = vunpack.c.l.b16 %v13
  %v67 = vunpack.c.h.b16 %v13
  %v68 = vunpack.c.l.b16 %v14
  %v69 = vunpack.c.h.b16 %v14
  %v70 = vunpack.c.l.b16 %v15
  %v71 = vunpack.c.h.b16 %v15
  %v72 = vunpack.c.l.b16 %v16
  %v73 = vunpack.c.h.b16 %v16
  %v74 = vunpack.c.l.b16 %v17
  %v75 = vunpack.c.h.b16 %v17
  %v76 = vunpack.c.l.b16 %v18
  %v77 = vunpack.c.h.b16 %v18
  %v78 = vunpack.c.l.b16 %v19
  %v79 = vunpack.c.h.b16 %v19
  %v80 = vunpack.c.l.b16 %v20
  %v81 = vunpack.c.h.b16 %v20
  %v82 = vunpack.c.l.b16 %v21
  %v83 = vunpack.c.h.b16 %v21
  %v84 = vunpack.c.l.b16 %v22
  %v85 = vunpack.c.h.b16 %v22
  %v86 = vunpack.c.l.b16 %v23
  %v87 = vunpack.c.h.b16 %v23
  %v88 = vunpack.c.l.b16 %v24
  %v89 = vunpack.c.h.b16 %v24
  %v90 = vunpack.c.l.b16 %v25
  %v91 = vunpack.c.h.b16 %v25
  %v92 = vunpack.c.l.b16 %v26
  %v93 = vunpack.c.h.b16 %v26
  %v94 = vunpack.c.l.b16 %v27
  %v95 = vunpack.c.h.b16 %v27
  %v96 = vpack.c.b16 %v66, %v64
  %v97 = vpack.c.b16 %v67, %v65
  %v98 = vpack.c.b16 %v70, %v68
  %v99 = vpack.c.b16 %v71, %v69
  %v100 = vpack.c.b16 %v74, %v72
  %v101 = vpack.c.b16 %v75, %v73
  %v102 = vpack.c.b16 %v78, %v76
  %v103 = vpack.c.b16 %v79, %v77
  %v104 = vpack.c.b16 %v82, %v80
  %v105 = vpack.c.b16 %v83, %v81
  %v106 = vpack.c.b16 %v86, %v84
  %v107 = vpack.c.b16 %v87, %v85
  %v108 = vpack.c.b16 %v90, %v88
  %v109 = vpack.c.b16 %v91, %v89
  %v110 = vpack.c.b16 %v94, %v92
  %v111 = vpack.c.b16 %v95, %v93
  %v140 = vunpack.c.l.b16 %v28
  %v141 = vunpack.c.l.b16 %v29
  %v142 = vunpack.c.l.b16 %v30
  %v143 = vunpack.c.l.b16 %v31
  %v144 = vunpack.c.l.b16 %v32
  %v145 = vunpack.c.l.b16 %v33
  %v146 = vunpack.c.l.b16 %v34
  %v147 = vunpack.c.l.b16 %v35
  %v148 = vunpack.c.l.b16 %v36
  %v149 = vunpack.c.l.b16 %v37
  %v150 = vunpack.c.l.b16 %v38
  %v151 = vunpack.c.l.b16 %v39
  %v152 = vunpack.c.l.b16 %v40
  %v153 = vunpack.c.l.b16 %v41
  %v154 = vunpack.c.l.b16 %v42
  %v155 = vunpack.c.l.b16 %v43
  %v156 = vunpack.c.l.b16 %v44
  %v157 = vunpack.c.l.b16 %v45
  %v158 = vunpack.c.l.b16 %v46
  %v159 = vunpack.c.l.b16 %v47
  %v160 = vpack.c.b16 %v141, %v140
  %v161 = vpack.c.b16 %v143, %v142
  %v162 = vpack.c.b16 %v145, %v144
  %v163 = vpack.c.b16 %v147, %v146
  %v164 = vpack.c.b16 %v149, %v148
  %v165 = vpack.c.b16 %v151, %v150
  %v166 = vpack.c.b16 %v153, %v152
  %v167 = vpack.c.b16 %v155, %v154
  %v168 = vpack.c.b16 %v157, %v156
  %v169 = vpack.c.b16 %v159, %v158
  %vm180 = vcmask 261120
  %v182 = vsel %vm180, %v97, 0
  %v185 = vsel %vm180, %v99, 0
  %v188 = vsel %vm180, %v101, 0
  %v191 = vsel %vm180, %v103, 0
  %v194 = vsel %vm180, %v105, 0
  %v197 = vsel %vm180, %v107, 0
  %v200 = vsel %vm180, %v109, 0
  %v203 = vsel %vm180, %v111, 0
  %205 = vmatprep.subr.bf16.mxu0 0
  %206 = vmatpush1.bf16.msra.mxu0 %v167
  %207 = vmatprep.subr.bf16.mxu0 0
  %208 = vmatpush1.bf16.msra.mxu0 %v166
  %209 = vmatprep.subr.bf16.mxu0 0
  %210 = vmatpush1.bf16.msra.mxu0 %v165
  %211 = vmatprep.subr.bf16.mxu0 0
  %212 = vmatpush1.bf16.msra.mxu0 %v164
  %213 = vmatprep.subr.bf16.mxu0 0
  %214 = vmatpush1.bf16.msra.mxu0 %v163
  %215 = vmatprep.subr.bf16.mxu0 0
  %216 = vmatpush1.bf16.msra.mxu0 %v162
  %217 = vmatprep.subr.bf16.mxu0 0
  %218 = vmatpush1.bf16.msra.mxu0 %v161
  %219 = vmatprep.subr.bf16.mxu0 0
  %220 = vmatpush1.bf16.msra.mxu0 %v160
  %221 = vmatprep.subr.bf16.mxu0 0
  %222 = vmatpush2.bf16.msra.mxu0 0
  %223 = vmatprep.subr.bf16.mxu0 0
  %224 = vmatpush2.bf16.msra.mxu0 0
  %225 = vmatprep.subr.bf16.mxu0 0
  %226 = vmatpush2.bf16.msra.mxu0 0
  %227 = vmatprep.subr.bf16.mxu0 0
  %228 = vmatpush2.bf16.msra.mxu0 0
  %229 = vmatprep.subr.bf16.mxu0 0
  %230 = vmatpush2.bf16.msra.mxu0 0
  %231 = vmatprep.subr.bf16.mxu0 0
  %232 = vmatpush2.bf16.msra.mxu0 0
  %233 = vmatprep.subr.bf16.mxu0 0
  %234 = vmatpush2.bf16.msra.mxu0 %v169
  %235 = vmatprep.subr.bf16.mxu0 0
  %236 = vmatpush2.bf16.msra.mxu0 %v168
  %237 = vmatprep.mubr.bf16.mxu0 %v182
  %238 = vmatmul.mubr.bf16.gmra.mxu0 %v96
  %v239 = vpop.f32.mrf.mxu0
  %v240 = vadd.f32 0.0, %v239
  %v241 = vpop.f32.mrf.mxu0
  %v242 = vpop.f32.mrf.mxu0
  %v243 = vadd.f32 0.0, %v242
  %v244 = vpop.f32.mrf.mxu0
  %245 = vmatprep.mubr.bf16.mxu0 %v185
  %246 = vmatmul.mubr.bf16.gmra.mxu0 %v98
  %v247 = vpop.f32.mrf.mxu0
  %v248 = vadd.f32 0.0, %v247
  %v249 = vpop.f32.mrf.mxu0
  %v250 = vpop.f32.mrf.mxu0
  %v251 = vadd.f32 0.0, %v250
  %v252 = vpop.f32.mrf.mxu0
  %253 = vmatprep.mubr.bf16.mxu0 %v188
  %254 = vmatmul.mubr.bf16.gmra.mxu0 %v100
  %v255 = vpop.f32.mrf.mxu0
  %v256 = vadd.f32 0.0, %v255
  %v257 = vpop.f32.mrf.mxu0
  %v258 = vpop.f32.mrf.mxu0
  %v259 = vadd.f32 0.0, %v258
  %v260 = vpop.f32.mrf.mxu0
  %261 = vmatprep.mubr.bf16.mxu0 %v191
  %262 = vmatmul.mubr.bf16.gmra.mxu0 %v102
  %v263 = vpop.f32.mrf.mxu0
  %v264 = vadd.f32 0.0, %v263
  %v265 = vpop.f32.mrf.mxu0
  %v266 = vpop.f32.mrf.mxu0
  %v267 = vadd.f32 0.0, %v266
  %v268 = vpop.f32.mrf.mxu0
  %269 = vmatprep.mubr.bf16.mxu0 %v194
  %270 = vmatmul.mubr.bf16.gmra.mxu0 %v104
  %v271 = vpop.f32.mrf.mxu0
  %v272 = vadd.f32 0.0, %v271
  %v273 = vpop.f32.mrf.mxu0
  %v274 = vpop.f32.mrf.mxu0
  %v275 = vadd.f32 0.0, %v274
  %v276 = vpop.f32.mrf.mxu0
  %277 = vmatprep.mubr.bf16.mxu0 %v197
  %278 = vmatmul.mubr.bf16.gmra.mxu0 %v106
  %v279 = vpop.f32.mrf.mxu0
  %v280 = vadd.f32 0.0, %v279
  %v281 = vpop.f32.mrf.mxu0
  %v282 = vpop.f32.mrf.mxu0
  %v283 = vadd.f32 0.0, %v282
  %v284 = vpop.f32.mrf.mxu0
  %285 = vmatprep.mubr.bf16.mxu0 %v200
  %286 = vmatmul.mubr.bf16.gmra.mxu0 %v108
  %v287 = vpop.f32.mrf.mxu0
  %v288 = vadd.f32 0.0, %v287
  %v289 = vpop.f32.mrf.mxu0
  %v290 = vpop.f32.mrf.mxu0
  %v291 = vadd.f32 0.0, %v290
  %v292 = vpop.f32.mrf.mxu0
  %293 = vmatprep.mubr.bf16.mxu0 %v203
  %294 = vmatmul.mubr.bf16.gmra.mxu0 %v110
  %v295 = vpop.f32.mrf.mxu0
  %v296 = vadd.f32 0.0, %v295
  %v297 = vpop.f32.mrf.mxu0
  %v298 = vpop.f32.mrf.mxu0
  %v299 = vadd.f32 0.0, %v298
  %v300 = vpop.f32.mrf.mxu0
  %301 = vdwg.mxu0
  %v302 = vpack.c.bf16 %v243, %v240
  %v303 = vpack.c.bf16 %v251, %v248
  %v304 = vpack.c.bf16 %v259, %v256
  %v305 = vpack.c.bf16 %v267, %v264
  %v306 = vpack.c.bf16 %v275, %v272
  %v307 = vpack.c.bf16 %v283, %v280
  %v308 = vpack.c.bf16 %v291, %v288
  %v309 = vpack.c.bf16 %v299, %v296
  %v318 = vunpack.c.l.b16 %v302
  %v319 = vunpack.c.h.b16 %v302
  %v320 = vunpack.c.l.b16 %v303
  %v321 = vunpack.c.h.b16 %v303
  %v322 = vunpack.c.l.b16 %v304
  %v323 = vunpack.c.h.b16 %v304
  %v324 = vunpack.c.l.b16 %v305
  %v325 = vunpack.c.h.b16 %v305
  %v326 = vunpack.c.l.b16 %v306
  %v327 = vunpack.c.h.b16 %v306
  %v328 = vunpack.c.l.b16 %v307
  %v329 = vunpack.c.h.b16 %v307
  %v330 = vunpack.c.l.b16 %v308
  %v331 = vunpack.c.h.b16 %v308
  %v332 = vunpack.c.l.b16 %v309
  %v333 = vunpack.c.h.b16 %v309
  %v334 = vpack.c.b16 %v318, %v318
  %v335 = vpack.c.b16 %v319, %v319
  %v336 = vpack.c.b16 %v320, %v320
  %v337 = vpack.c.b16 %v321, %v321
  %v338 = vpack.c.b16 %v322, %v322
  %v339 = vpack.c.b16 %v323, %v323
  %v340 = vpack.c.b16 %v324, %v324
  %v341 = vpack.c.b16 %v325, %v325
  %v342 = vpack.c.b16 %v326, %v326
  %v343 = vpack.c.b16 %v327, %v327
  %v344 = vpack.c.b16 %v328, %v328
  %v345 = vpack.c.b16 %v329, %v329
  %v346 = vpack.c.b16 %v330, %v330
  %v347 = vpack.c.b16 %v331, %v331
  %v348 = vpack.c.b16 %v332, %v332
  %v349 = vpack.c.b16 %v333, %v333
  %vm366 = vcmask 519168
  %367 = vst.msk [vmem:[%s2] sm:$0xf] %vm366, %v334
  %368 = vst.msk [vmem:[%s2 + $0x4] sm:$0xf] %vm366, %v335
  %369 = vst.msk [vmem:[%s2 + $0x8] sm:$0xf] %vm366, %v336
  %370 = vst.msk [vmem:[%s2 + $0xc] sm:$0xf] %vm366, %v337
  %371 = vst.msk [vmem:[%s2 + $0x10] sm:$0xf] %vm366, %v338
  %372 = vst.msk [vmem:[%s2 + $0x14] sm:$0xf] %vm366, %v339
  %373 = vst.msk [vmem:[%s2 + $0x18] sm:$0xf] %vm366, %v340
  %374 = vst.msk [vmem:[%s2 + $0x1c] sm:$0xf] %vm366, %v341
  %375 = vst.msk [vmem:[%s2 + $0x20] sm:$0xf] %vm366, %v342
  %376 = vst.msk [vmem:[%s2 + $0x24] sm:$0xf] %vm366, %v343
  %377 = vst.msk [vmem:[%s2 + $0x28] sm:$0xf] %vm366, %v344
  %378 = vst.msk [vmem:[%s2 + $0x2c] sm:$0xf] %vm366, %v345
  %379 = vst.msk [vmem:[%s2 + $0x30] sm:$0xf] %vm366, %v346
  %380 = vst.msk [vmem:[%s2 + $0x34] sm:$0xf] %vm366, %v347
  %381 = vst.msk [vmem:[%s2 + $0x38] sm:$0xf] %vm366, %v348
  %382 = vst.msk [vmem:[%s2 + $0x3c] sm:$0xf] %vm366, %v349
  // Predicated region
  $region10: #{pool_model_forward.3} parent=0 // pred_check
    _
  $region11: #{pool_model_forward.3} parent=0 // pred_check_branch
    %384 = sbr.rel (0) target = $region13
  $region12: #{pool_model_forward.3} parent=0 // pred_region
    _
  $region13: #{pool_model_forward.3} parent=0 // pred_fallthru
    _
  // Predicated region
  $region14: #{pool_model_forward.3} parent=0 // pred_check
    _
  $region15: #{pool_model_forward.3} parent=0 // pred_check_branch
    %386 = sbr.rel (0) target = $region17
  $region16: #{pool_model_forward.3} parent=0 // pred_region
    _
  $region17: #{pool_model_forward.3} parent=0 // pred_fallthru
    _

// kernel: pool_model_forward.4
$region0: #{pool_model_forward.4}
  #allocation0 [shape = 'u32[]', space=smem, size = 0x4, offset = 0x4, fixed_abs, tag = 'smem constant byte address 0x4 - core index']
  #allocation1 [shape = 'u32[144,128]{1,0:T(1,128)}', space=vmem, size = 0x12000, scoped, tag = 'internal scratch']
  #allocation2 [shape = 'f32[8,1,64]{2,1,0:T(1,128)}', space=vmem, size = 0x1000, scoped, tag = 'scratch operand']
  %s0 = inlined_call_operand.vmem [shape: bf16[2,8,8,64], index: 0, kind: input, shape index: {}]
  %s1 = inlined_call_operand.vmem [shape: f32[2,1,64], index: 1, kind: output, shape index: {0}]
  %s2 = inlined_call_operand.vmem [shape: f32[2,1,64], index: 2, kind: output, shape index: {1}]
  %3 = xla_tuple %s1, %s2
  %s4 = sld [smem:[#allocation0]]
  $region49: #{pool_model_forward.4} parent=0
    _
  %s6 = ssub.s32 1, %s4
  %s7 = scalar_select 0, %s6, %s4
  loop: start=0, step=1, limit=4
  $region2: #{pool_model_forward.4} parent=0 // loop_pre_header
    _
  $region3: #{pool_model_forward.4} parent=0 // loop_header
    %s9 = sphi 0, %s13
    %p10 = scmp.ge.s32.totalorder %s9, 4
    %s16 = sphi 0, %s28
    %s17 = sphi 0, %s24
    %s18 = sphi 0, %s16
    %s19 = sphi 0, %s17
    %s20 = sphi 0, %s18
    %s21 = sphi 0, %s19
    %s35 = sphi 0, %s37
    %s38 = sphi 0, %s35
    %s39 = sphi 0, %s38
    %s55 = sphi 0, %s39
    %s61 = sphi 0, %s63
    %s64 = sphi 0, %s61
    %s65 = sphi 0, %s64
    %s81 = sphi 0, %s65
    %s87 = sphi 0, %s89
    %s90 = sphi 0, %s87
    %s91 = sphi 0, %s90
    %s107 = sphi 0, %s91
  $region4: #{pool_model_forward.4} parent=0 // loop_header_branch
    %12 = sbr.rel (%p10) target = $region8
  $region5: #{pool_model_forward.4} parent=0 // loop_body
    %s14 = ssub.s32 %s9, 1
    %s15 = ssub.s32 %s9, 2
    %s22 = sadd.s32 1, %s17
    %p23 = scmp.ge.s32.totalorder %s22, 1
    %s24 = scalar_select %p23, 0, %s22
    %s25 = sadd.s32 1, %s16
    %s26 = scalar_select %p23, %s25, %s16
    %p27 = scmp.ge.s32.totalorder %s26, 2
    %s28 = scalar_select %p27, 0, %s26
    %s29 = ssub.s32 0, %s17
    %s30 = ssub.s32 0, %s24
    %s31 = ssub.s32 %s16, %s28
    %s32 = ssub.s32 %s29, %s30
    %s33 = sor.u32 %s31, %s32
    %p34 = scmp.eq.s32.totalorder %s33, 0
    %s36 = sadd.s32 %s35, 1
    %s37 = scalar_select %p34, %s35, %s36
    %p40 = pneg %p34
    %p41 = scmp.eq.s32.totalorder %s9, 1
    %p42 = por %p40, %p41
    %p43 = scmp.ne.s32.totalorder %s35, %s38
    %p44 = scmp.eq.s32.totalorder %s9, 0
    %p45 = por %p43, %p44
    %p46 = scmp.ne.s32.totalorder %s35, %s38
    %p47 = scmp.eq.s32.totalorder %s14, 1
    %p48 = por %p46, %p47
    %p49 = scmp.ne.s32.totalorder %s38, %s39
    %p50 = scmp.eq.s32.totalorder %s14, 0
    %p51 = por %p49, %p50
    %p52 = scmp.ne.s32.totalorder %s38, %s39
    %p53 = scmp.eq.s32.totalorder %s15, 1
    %p54 = por %p52, %p53
    %p56 = scmp.ne.s32.totalorder %s39, %s55
    %p57 = scmp.eq.s32.totalorder %s15, 0
    %p58 = por %p56, %p57
    %s59 = ssub.s32 %s16, %s28
    %p60 = scmp.eq.s32.totalorder %s59, 0
    %s62 = sadd.s32 %s61, 1
    %s63 = scalar_select %p60, %s61, %s62
    %p66 = pneg %p60
    %p67 = scmp.eq.s32.totalorder %s9, 1
    %p68 = por %p66, %p67
    %p69 = scmp.ne.s32.totalorder %s61, %s64
    %p70 = scmp.eq.s32.totalorder %s9, 0
    %p71 = por %p69, %p70
    %p72 = scmp.ne.s32.totalorder %s61, %s64
    %p73 = scmp.eq.s32.totalorder %s14, 1
    %p74 = por %p72, %p73
    %p75 = scmp.ne.s32.totalorder %s64, %s65
    %p76 = scmp.eq.s32.totalorder %s14, 0
    %p77 = por %p75, %p76
    %p78 = scmp.ne.s32.totalorder %s64, %s65
    %p79 = scmp.eq.s32.totalorder %s15, 1
    %p80 = por %p78, %p79
    %p82 = scmp.ne.s32.totalorder %s65, %s81
    %p83 = scmp.eq.s32.totalorder %s15, 0
    %p84 = por %p82, %p83
    %s85 = ssub.s32 %s16, %s28
    %p86 = scmp.eq.s32.totalorder %s85, 0
    %s88 = sadd.s32 %s87, 1
    %s89 = scalar_select %p86, %s87, %s88
    %p92 = pneg %p86
    %p93 = scmp.eq.s32.totalorder %s9, 1
    %p94 = por %p92, %p93
    %p95 = scmp.ne.s32.totalorder %s87, %s90
    %p96 = scmp.eq.s32.totalorder %s9, 0
    %p97 = por %p95, %p96
    %p98 = scmp.ne.s32.totalorder %s87, %s90
    %p99 = scmp.eq.s32.totalorder %s14, 1
    %p100 = por %p98, %p99
    %p101 = scmp.ne.s32.totalorder %s90, %s91
    %p102 = scmp.eq.s32.totalorder %s14, 0
    %p103 = por %p101, %p102
    %p104 = scmp.ne.s32.totalorder %s90, %s91
    %p105 = scmp.eq.s32.totalorder %s15, 1
    %p106 = por %p104, %p105
    %p108 = scmp.ne.s32.totalorder %s91, %s107
    %p109 = scmp.eq.s32.totalorder %s15, 0
    %p110 = por %p108, %p109
    %p111 = scmp.le.s32.totalorder 1, %s9
    %p112 = scmp.lt.s32.totalorder %s9, 3
    %p113 = pnand %p111, %p112
    %p114 = pneg %p113
    // Predicated region
    $region9: #{pool_model_forward.4} parent=5 // pred_check
      _
    $region10: #{pool_model_forward.4} parent=5 // pred_check_branch
      %116 = sbr.rel (%p113) target = $region12
    $region11: #{pool_model_forward.4} parent=5 // pred_region
      %s117 = ssub.s32 %s9, 1
    $region12: #{pool_model_forward.4} parent=5 // pred_fallthru
      _
    %p118 = scmp.lt.s32.totalorder %s9, 2
    // Predicated region
    $region13: #{pool_model_forward.4} parent=5 // pred_check
      %p119 = pneg %p118
    $region14: #{pool_model_forward.4} parent=5 // pred_check_branch
      %121 = sbr.rel (%p119) target = $region16
    $region15: #{pool_model_forward.4} parent=5 // pred_region
      // Predicated region
      $region17: #{pool_model_forward.4} parent=15 // pred_check
        %p122 = pneg %p45
      $region18: #{pool_model_forward.4} parent=15 // pred_check_branch
        %124 = sbr.rel (%p122) target = $region20
      $region19: #{pool_model_forward.4} parent=15 // pred_region
        %s125 = ssub.s32 0, %s17
        %p126 = scmp.lt.s32.totalorder %s16, 1
        %s127 = scalar_select %p126, %s16, 1
        %p128 = scmp.lt.s32.totalorder %s125, 0
        %s129 = scalar_select %p128, %s125, 0
        %s130 = smul.addr %s127, 8
        %s131 = sadd.s32 %s129, %s130
        %s132 = smul.addr %s131, 4
        %s133 = scalar_lea.vmem %s0, %s132
        %s134 = ssub.s32 0, %s17
      $region20: #{pool_model_forward.4} parent=15 // pred_fallthru
        _
    $region16: #{pool_model_forward.4} parent=5 // pred_fallthru
      _
    %p135 = scmp.le.s32.totalorder 1, %s9
    %p136 = scmp.lt.s32.totalorder %s9, 3
    %p137 = pnand %p135, %p136
    %p138 = pneg %p137
    // Predicated region
    $region21: #{pool_model_forward.4} parent=5 // pred_check
      _
    $region22: #{pool_model_forward.4} parent=5 // pred_check_branch
      %140 = sbr.rel (%p137) target = $region24
    $region23: #{pool_model_forward.4} parent=5 // pred_region
      %s141 = ssub.s32 %s9, 1
      %s142 = ssub.s32 0, %s19
      %p143 = scmp.lt.s32.totalorder %s18, 1
      %s144 = scalar_select %p143, %s18, 1
      %p145 = scmp.lt.s32.totalorder %s142, 0
      %s146 = scalar_select %p145, %s142, 0
      %s147 = smul.addr %s144, 8
      %s148 = sadd.s32 %s146, %s147
      %s149 = smul.addr %s148, 4
      %s150 = scalar_lea.vmem %s0, %s149
      %p151 = pneg %p51
      %p152 = pneg %p48
      %p153 = pneg %p77
      %p154 = pneg %p74
      %p155 = scmp.lt.s32.totalorder %s18, 1
      %s156 = scalar_select %p155, %s18, 1
      %s157 = scalar_lea.vmem %s1, %s156
      %p158 = pneg %p103
      %p159 = pneg %p100
      %p160 = scmp.lt.s32.totalorder %s18, 1
      %s161 = scalar_select %p160, %s18, 1
      %s162 = scalar_lea.vmem %s2, %s161
      %s163 = ssub.s32 0, %s19
      %p164 = scmp.lt.s32.totalorder %s18, 1
      %s165 = scalar_select %p164, %s18, 1
      %p166 = scmp.lt.s32.totalorder %s163, 0
      %s167 = scalar_select %p166, %s163, 0
      %s168 = smul.addr %s165, 8
      %s169 = sadd.s32 %s167, %s168
      %s170 = smul.addr %s169, 4
      %s171 = scalar_lea.vmem %s0, %s170
      %s172 = ssub.s32 0, %s19
      %p173 = scmp.lt.s32.totalorder %s18, 1
      %s174 = scalar_select %p173, %s18, 1
      %s175 = scalar_lea.vmem %s1, %s174
      %p176 = scmp.lt.s32.totalorder %s18, 1
      %s177 = scalar_select %p176, %s18, 1
      %s178 = scalar_lea.vmem %s2, %s177
      %p179 = scmp.eq.s32.totalorder %s19, 0
      // Predicated region
      $region25: #{pool_model_forward.4} parent=23 // pred_check
        %p180 = pneg %p179
      $region26: #{pool_model_forward.4} parent=23 // pred_check_branch
        %182 = sbr.rel (%p180) target = $region28
      $region27: #{pool_model_forward.4} parent=23 // pred_region
        %vm183 = vcmask 516096
        %184 = vst.msk [vmem:[#allocation2] sm:$0x1] %vm183, -3.4028235e+38
        %185 = vst.msk [vmem:[#allocation2 + $0x1] sm:$0x1] %vm183, -3.4028235e+38
        %186 = vst.msk [vmem:[#allocation2 + $0x2] sm:$0x1] %vm183, -3.4028235e+38
        %187 = vst.msk [vmem:[#allocation2 + $0x3] sm:$0x1] %vm183, -3.4028235e+38
        %188 = vst.msk [vmem:[#allocation2 + $0x4] sm:$0x1] %vm183, -3.4028235e+38
        %189 = vst.msk [vmem:[#allocation2 + $0x5] sm:$0x1] %vm183, -3.4028235e+38
        %190 = vst.msk [vmem:[#allocation2 + $0x6] sm:$0x1] %vm183, -3.4028235e+38
        %191 = vst.msk [vmem:[#allocation2 + $0x7] sm:$0x1] %vm183, -3.4028235e+38
        %192 = vst.msk [vmem:[%s175] sm:$0x1] %vm183, 0.0
        %193 = vst.msk [vmem:[%s178] sm:$0x1] %vm183, 0.0
      $region28: #{pool_model_forward.4} parent=23 // pred_fallthru
        _
      %v194 = vld [vmem:[%s171] sm:$0xf]
      %v195 = vld [vmem:[%s171 + $0x4] sm:$0xf]
      %v196 = vld [vmem:[%s171 + $0x8] sm:$0xf]
      %v197 = vld [vmem:[%s171 + $0xc] sm:$0xf]
      %v198 = vld [vmem:[%s171 + $0x10] sm:$0xf]
      %v199 = vld [vmem:[%s171 + $0x14] sm:$0xf]
      %v200 = vld [vmem:[%s171 + $0x18] sm:$0xf]
      %v201 = vld [vmem:[%s171 + $0x1c] sm:$0xf]
      %v202 = vunpack.c.l.bf16 %v194
      %v203 = vunpack.c.l.bf16 %v195
      %v204 = vunpack.c.l.bf16 %v196
      %v205 = vunpack.c.l.bf16 %v197
      %v206 = vunpack.c.l.bf16 %v198
      %v207 = vunpack.c.l.bf16 %v199
      %v208 = vunpack.c.l.bf16 %v200
      %v209 = vunpack.c.l.bf16 %v201
      %v210 = vld [vmem:[#allocation2] sm:$0x1]
      %v211 = vld [vmem:[#allocation2 + $0x1] sm:$0x1]
      %v212 = vld [vmem:[#allocation2 + $0x2] sm:$0x1]
      %v213 = vld [vmem:[#allocation2 + $0x3] sm:$0x1]
      %v214 = vld [vmem:[#allocation2 + $0x4] sm:$0x1]
      %v215 = vld [vmem:[#allocation2 + $0x5] sm:$0x1]
      %v216 = vld [vmem:[#allocation2 + $0x6] sm:$0x1]
      %v217 = vld [vmem:[#allocation2 + $0x7] sm:$0x1]
      %v218 = vsel 1, %v203, -3.4028235e+38
      %v219 = vsel 1, %v204, -3.4028235e+38
      %v220 = vsel 1, %v205, -3.4028235e+38
      %v221 = vsel 1, %v206, -3.4028235e+38
      %v222 = vsel 1, %v207, -3.4028235e+38
      %v223 = vsel 1, %v208, -3.4028235e+38
      %v224 = vsel 1, %v209, -3.4028235e+38
      %v225 = vsel 0, %v202, -3.4028235e+38
      %v226 = vmax.f32 %v202, %v218
      %v227 = vmax.f32 %v203, %v219
      %v228 = vmax.f32 %v204, %v220
      %v229 = vmax.f32 %v205, %v221
      %v230 = vmax.f32 %v206, %v222
      %v231 = vmax.f32 %v207, %v223
      %v232 = vmax.f32 %v208, %v224
      %v233 = vmax.f32 %v209, %v225
      %v234 = vsel 1, %v228, -3.4028235e+38
      %v235 = vsel 1, %v229, -3.4028235e+38
      %v236 = vsel 1, %v230, -3.4028235e+38
      %v237 = vsel 1, %v231, -3.4028235e+38
      %v238 = vsel 1, %v232, -3.4028235e+38
      %v239 = vsel 1, %v233, -3.4028235e+38
      %v240 = vsel 0, %v226, -3.4028235e+38
      %v241 = vsel 0, %v227, -3.4028235e+38
      %v242 = vmax.f32 %v226, %v234
      %v243 = vmax.f32 %v227, %v235
      %v244 = vmax.f32 %v228, %v236
      %v245 = vmax.f32 %v229, %v237
      %v246 = vmax.f32 %v230, %v238
      %v247 = vmax.f32 %v231, %v239
      %v248 = vmax.f32 %v232, %v240
      %v249 = vmax.f32 %v233, %v241
      %v250 = vsel 1, %v246, -3.4028235e+38
      %v251 = vsel 1, %v247, -3.4028235e+38
      %v252 = vsel 1, %v248, -3.4028235e+38
      %v253 = vsel 1, %v249, -3.4028235e+38
      %v254 = vsel 0, %v242, -3.4028235e+38
      %v255 = vsel 0, %v243, -3.4028235e+38
      %v256 = vsel 0, %v244, -3.4028235e+38
      %v257 = vsel 0, %v245, -3.4028235e+38
      %v258 = vmax.f32 %v242, %v250
      %v259 = vmax.f32 %v243, %v251
      %v260 = vmax.f32 %v244, %v252
      %v261 = vmax.f32 %v245, %v253
      %v262 = vmax.f32 %v246, %v254
      %v263 = vmax.f32 %v247, %v255
      %v264 = vmax.f32 %v248, %v256
      %v265 = vmax.f32 %v249, %v257
      %v266 = vlaneseq
      %v267 = vshrl.u32 %v266, 7
      %vm268 = vcmp.lt.s32.totalorder %v267, 7
      %v277 = vrot.slane %v202, 1
      %v278 = vrot.slane %v203, 1
      %v279 = vrot.slane %v204, 1
      %v280 = vrot.slane %v205, 1
      %v281 = vrot.slane %v206, 1
      %v282 = vrot.slane %v207, 1
      %v283 = vrot.slane %v208, 1
      %v284 = vrot.slane %v209, 1
      %vm293 = vcmask 1046528
      %v294 = vsel %vm293, %v277, %v277
      %v295 = vsel %vm293, %v278, %v278
      %v296 = vsel %vm293, %v279, %v279
      %v297 = vsel %vm293, %v280, %v280
      %v298 = vsel %vm293, %v281, %v281
      %v299 = vsel %vm293, %v282, %v282
      %v300 = vsel %vm293, %v283, %v283
      %v301 = vsel %vm293, %v284, %v284
      %v302 = vsel %vm268, 1, 0
      %vm303 = vcmp.eq.s32.totalorder %v302, 1
      %v304 = vsel %vm303, %v294, -3.4028235e+38
      %v305 = vsel %vm303, %v295, -3.4028235e+38
      %v306 = vsel %vm303, %v296, -3.4028235e+38
      %v307 = vsel %vm303, %v297, -3.4028235e+38
      %v308 = vsel %vm303, %v298, -3.4028235e+38
      %v309 = vsel %vm303, %v299, -3.4028235e+38
      %v310 = vsel %vm303, %v300, -3.4028235e+38
      %v311 = vsel %vm303, %v301, -3.4028235e+38
      %v312 = vmax.f32 %v202, %v304
      %v313 = vmax.f32 %v203, %v305
      %v314 = vmax.f32 %v204, %v306
      %v315 = vmax.f32 %v205, %v307
      %v316 = vmax.f32 %v206, %v308
      %v317 = vmax.f32 %v207, %v309
      %v318 = vmax.f32 %v208, %v310
      %v319 = vmax.f32 %v209, %v311
      %vm320 = vcmp.lt.s32.totalorder %v267, 6
      %v329 = vrot.slane %v312, 2
      %v330 = vrot.slane %v313, 2
      %v331 = vrot.slane %v314, 2
      %v332 = vrot.slane %v315, 2
      %v333 = vrot.slane %v316, 2
      %v334 = vrot.slane %v317, 2
      %v335 = vrot.slane %v318, 2
      %v336 = vrot.slane %v319, 2
      %vm345 = vcmask 1045504
      %v346 = vsel %vm345, %v329, %v329
      %v347 = vsel %vm345, %v330, %v330
      %v348 = vsel %vm345, %v331, %v331
      %v349 = vsel %vm345, %v332, %v332
      %v350 = vsel %vm345, %v333, %v333
      %v351 = vsel %vm345, %v334, %v334
      %v352 = vsel %vm345, %v335, %v335
      %v353 = vsel %vm345, %v336, %v336
      %v354 = vsel %vm320, 1, 0
      %vm355 = vcmp.eq.s32.totalorder %v354, 1
      %v356 = vsel %vm355, %v346, -3.4028235e+38
      %v357 = vsel %vm355, %v347, -3.4028235e+38
      %v358 = vsel %vm355, %v348, -3.4028235e+38
      %v359 = vsel %vm355, %v349, -3.4028235e+38
      %v360 = vsel %vm355, %v350, -3.4028235e+38
      %v361 = vsel %vm355, %v351, -3.4028235e+38
      %v362 = vsel %vm355, %v352, -3.4028235e+38
      %v363 = vsel %vm355, %v353, -3.4028235e+38
      %v364 = vmax.f32 %v312, %v356
      %v365 = vmax.f32 %v313, %v357
      %v366 = vmax.f32 %v314, %v358
      %v367 = vmax.f32 %v315, %v359
      %v368 = vmax.f32 %v316, %v360
      %v369 = vmax.f32 %v317, %v361
      %v370 = vmax.f32 %v318, %v362
      %v371 = vmax.f32 %v319, %v363
      %vm372 = vcmp.lt.s32.totalorder %v267, 4
      %v381 = vrot.slane %v364, 4
      %v382 = vrot.slane %v365, 4
      %v383 = vrot.slane %v366, 4
      %v384 = vrot.slane %v367, 4
      %v385 = vrot.slane %v368, 4
      %v386 = vrot.slane %v369, 4
      %v387 = vrot.slane %v370, 4
      %v388 = vrot.slane %v371, 4
      %vm397 = vcmask 1043456
      %v398 = vsel %vm397, %v381, %v381
      %v399 = vsel %vm397, %v382, %v382
      %v400 = vsel %vm397, %v383, %v383
      %v401 = vsel %vm397, %v384, %v384
      %v402 = vsel %vm397, %v385, %v385
      %v403 = vsel %vm397, %v386, %v386
      %v404 = vsel %vm397, %v387, %v387
      %v405 = vsel %vm397, %v388, %v388
      %v406 = vsel %vm372, 1, 0
      %vm407 = vcmp.eq.s32.totalorder %v406, 1
      %v408 = vsel %vm407, %v398, -3.4028235e+38
      %v409 = vsel %vm407, %v399, -3.4028235e+38
      %v410 = vsel %vm407, %v400, -3.4028235e+38
      %v411 = vsel %vm407, %v401, -3.4028235e+38
      %v412 = vsel %vm407, %v402, -3.4028235e+38
      %v413 = vsel %vm407, %v403, -3.4028235e+38
      %v414 = vsel %vm407, %v404, -3.4028235e+38
      %v415 = vsel %vm407, %v405, -3.4028235e+38
      %v416 = vmax.f32 %v364, %v408
      %v417 = vmax.f32 %v365, %v409
      %v418 = vmax.f32 %v366, %v410
      %v419 = vmax.f32 %v367, %v411
      %v420 = vmax.f32 %v368, %v412
      %v421 = vmax.f32 %v369, %v413
      %v422 = vmax.f32 %v370, %v414
      %v423 = vmax.f32 %v371, %v415
      %v432 = vlaneseq
      %v433 = vshrl.u32 %v432, 7
      %v434 = vsub.s32 0, %v433
      %v435 = vrot.slane %v210, %v434
      %v436 = vlaneseq
      %v437 = vshrl.u32 %v436, 7
      %v438 = vsub.s32 0, %v437
      %v439 = vrot.slane %v211, %v438
      %v440 = vlaneseq
      %v441 = vshrl.u32 %v440, 7
      %v442 = vsub.s32 0, %v441
      %v443 = vrot.slane %v212, %v442
      %v444 = vlaneseq
      %v445 = vshrl.u32 %v444, 7
      %v446 = vsub.s32 0, %v445
      %v447 = vrot.slane %v213, %v446
      %v448 = vlaneseq
      %v449 = vshrl.u32 %v448, 7
      %v450 = vsub.s32 0, %v449
      %v451 = vrot.slane %v214, %v450
      %v452 = vlaneseq
      %v453 = vshrl.u32 %v452, 7
      %v454 = vsub.s32 0, %v453
      %v455 = vrot.slane %v215, %v454
      %v456 = vlaneseq
      %v457 = vshrl.u32 %v456, 7
      %v458 = vsub.s32 0, %v457
      %v459 = vrot.slane %v216, %v458
      %v460 = vlaneseq
      %v461 = vshrl.u32 %v460, 7
      %v462 = vsub.s32 0, %v461
      %v463 = vrot.slane %v217, %v462
      %v472 = vmax.f32 %v416, %v435
      %v473 = vmax.f32 %v417, %v439
      %v474 = vmax.f32 %v418, %v443
      %v475 = vmax.f32 %v419, %v447
      %v476 = vmax.f32 %v420, %v451
      %v477 = vmax.f32 %v421, %v455
      %v478 = vmax.f32 %v422, %v459
      %v479 = vmax.f32 %v423, %v463
      %v480 = vadd.f32 %v258, %v472
      %v481 = vadd.f32 %v259, %v473
      %v482 = vadd.f32 %v260, %v474
      %v483 = vadd.f32 %v261, %v475
      %v484 = vadd.f32 %v262, %v476
      %v485 = vadd.f32 %v263, %v477
      %v486 = vadd.f32 %v264, %v478
      %v487 = vadd.f32 %v265, %v479
      %v488 = vmax.f32 %v480, 0.0
      %v489 = vmax.f32 %v481, 0.0
      %v490 = vmax.f32 %v482, 0.0
      %v491 = vmax.f32 %v483, 0.0
      %v492 = vmax.f32 %v484, 0.0
      %v493 = vmax.f32 %v485, 0.0
      %v494 = vmax.f32 %v486, 0.0
      %v495 = vmax.f32 %v487, 0.0
      %vm496 = vcmask 516096
      %497 = vst.msk [vmem:[#allocation2] sm:$0x1] %vm496, %v472
      %498 = vst.msk [vmem:[#allocation2 + $0x1] sm:$0x1] %vm496, %v473
      %499 = vst.msk [vmem:[#allocation2 + $0x2] sm:$0x1] %vm496, %v474
      %500 = vst.msk [vmem:[#allocation2 + $0x3] sm:$0x1] %vm496, %v475
      %501 = vst.msk [vmem:[#allocation2 + $0x4] sm:$0x1] %vm496, %v476
      %502 = vst.msk [vmem:[#allocation2 + $0x5] sm:$0x1] %vm496, %v477
      %503 = vst.msk [vmem:[#allocation2 + $0x6] sm:$0x1] %vm496, %v478
      %504 = vst.msk [vmem:[#allocation2 + $0x7] sm:$0x1] %vm496, %v479
      %v505 = vld [vmem:[%s175] sm:$0x1]
      %vm506 = vcmask 523264
      %v507 = vsel %vm506, %v488, 0.0
      %v508 = vsel %vm506, %v489, 0.0
      %v509 = vadd.f32 %v507, %v508
      %v510 = vsel %vm506, %v490, 0.0
      %v511 = vadd.f32 %v509, %v510
      %v512 = vsel %vm506, %v491, 0.0
      %v513 = vadd.f32 %v511, %v512
      %v514 = vsel %vm506, %v492, 0.0
      %v515 = vadd.f32 %v513, %v514
      %v516 = vsel %vm506, %v493, 0.0
      %v517 = vadd.f32 %v515, %v516
      %v518 = vsel %vm506, %v494, 0.0
      %v519 = vadd.f32 %v517, %v518
      %v520 = vsel %vm506, %v495, 0.0
      %v521 = vadd.f32 %v519, %v520
      %v522 = vrot.slane %v521, 4
      %v523 = vadd.f32 %v521, %v522
      %v524 = vrot.slane %v523, 2
      %v525 = vadd.f32 %v523, %v524
      %v526 = vrot.slane %v525, 1
      %v527 = vadd.f32 %v525, %v526
      %v528 = vadd.f32 %v505, %v527
      %529 = vst.msk [vmem:[%s175] sm:$0x1] %vm496, %v528
      %v530 = vld [vmem:[%s178] sm:$0x1]
      %v531 = vmul.f32 %v488, %v488
      %v532 = vmul.f32 %v489, %v489
      %v533 = vmul.f32 %v490, %v490
      %v534 = vmul.f32 %v491, %v491
      %v535 = vmul.f32 %v492, %v492
      %v536 = vmul.f32 %v493, %v493
      %v537 = vmul.f32 %v494, %v494
      %v538 = vmul.f32 %v495, %v495
      %v539 = vsel %vm506, %v531, 0.0
      %v540 = vsel %vm506, %v532, 0.0
      %v541 = vadd.f32 %v539, %v540
      %v542 = vsel %vm506, %v533, 0.0
      %v543 = vadd.f32 %v541, %v542
      %v544 = vsel %vm506, %v534, 0.0
      %v545 = vadd.f32 %v543, %v544
      %v546 = vsel %vm506, %v535, 0.0
      %v547 = vadd.f32 %v545, %v546
      %v548 = vsel %vm506, %v536, 0.0
      %v549 = vadd.f32 %v547, %v548
      %v550 = vsel %vm506, %v537, 0.0
      %v551 = vadd.f32 %v549, %v550
      %v552 = vsel %vm506, %v538, 0.0
      %v553 = vadd.f32 %v551, %v552
      %v554 = vrot.slane %v553, 4
      %v555 = vadd.f32 %v553, %v554
      %v556 = vrot.slane %v555, 2
      %v557 = vadd.f32 %v555, %v556
      %v558 = vrot.slane %v557, 1
      %v559 = vadd.f32 %v557, %v558
      %v560 = vadd.f32 %v530, %v559
      %561 = vst.msk [vmem:[%s178] sm:$0x1] %vm496, %v560
      %p562 = scmp.lt.s32.totalorder %s18, 1
      %s563 = scalar_select %p562, %s18, 1
      %s564 = scalar_lea.vmem %s1, %s563
      %p565 = scmp.lt.s32.totalorder %s18, 1
      %s566 = scalar_select %p565, %s18, 1
      %s567 = scalar_lea.vmem %s2, %s566
      // Predicated region
      $region29: #{pool_model_forward.4} parent=23 // pred_check
        %p568 = pneg %p74
      $region30: #{pool_model_forward.4} parent=23 // pred_check_branch
        %570 = sbr.rel (%p568) target = $region32
      $region31: #{pool_model_forward.4} parent=23 // pred_region
        _
      $region32: #{pool_model_forward.4} parent=23 // pred_fallthru
        _
      // Predicated region
      $region33: #{pool_model_forward.4} parent=23 // pred_check
        %p571 = pneg %p100
      $region34: #{pool_model_forward.4} parent=23 // pred_check_branch
        %573 = sbr.rel (%p571) target = $region36
      $region35: #{pool_model_forward.4} parent=23 // pred_region
        _
      $region36: #{pool_model_forward.4} parent=23 // pred_fallthru
        _
    $region24: #{pool_model_forward.4} parent=5 // pred_fallthru
      _
    %p574 = scmp.le.s32.totalorder 2, %s9
    // Predicated region
    $region37: #{pool_model_forward.4} parent=5 // pred_check
      %p575 = pneg %p574
    $region38: #{pool_model_forward.4} parent=5 // pred_check_branch
      %577 = sbr.rel (%p575) target = $region40
    $region39: #{pool_model_forward.4} parent=5 // pred_region
      %s578 = ssub.s32 %s9, 2
      // Predicated region
      $region41: #{pool_model_forward.4} parent=39 // pred_check
        %p579 = pneg %p80
      $region42: #{pool_model_forward.4} parent=39 // pred_check_branch
        %581 = sbr.rel (%p579) target = $region44
      $region43: #{pool_model_forward.4} parent=39 // pred_region
        %p582 = scmp.lt.s32.totalorder %s20, 1
        %s583 = scalar_select %p582, %s20, 1
        %s584 = scalar_lea.vmem %s1, %s583
      $region44: #{pool_model_forward.4} parent=39 // pred_fallthru
        _
      // Predicated region
      $region45: #{pool_model_forward.4} parent=39 // pred_check
        %p585 = pneg %p106
      $region46: #{pool_model_forward.4} parent=39 // pred_check_branch
        %587 = sbr.rel (%p585) target = $region48
      $region47: #{pool_model_forward.4} parent=39 // pred_region
        %p588 = scmp.lt.s32.totalorder %s20, 1
        %s589 = scalar_select %p588, %s20, 1
        %s590 = scalar_lea.vmem %s2, %s589
      $region48: #{pool_model_forward.4} parent=39 // pred_fallthru
        _
    $region40: #{pool_model_forward.4} parent=5 // pred_fallthru
      _
  $region6: #{pool_model_forward.4} parent=0 // loop_footer
    %s13 = sadd.s32 1, %s9
  $region7: #{pool_model_forward.4} parent=0 // loop_footer_branch
    %8 = sbr.rel target = $region3
  $region8: #{pool_model_forward.4} parent=0 // loop_exit
    _

</llo_original>
